<compile_context>
chip_gen: v5e
topology: v5e:2x2
jax: 0.10.0
libtpu: 0.0.40
codegen_flags: <defaults>
</compile_context>

<pallas_src>
import math

import jax
import jax.numpy as jnp
from jax.experimental import pallas as pl
from jax.experimental.pallas import tpu as pltpu


def _sine_pos_kernel(yx_ref, e_ref, freq_ref, phase_ref, o_ref):
    """One (row_block, w_block) tile per grid step, lane-dense output.

    yx_ref:    (Rt, 2*Wt)      bf16/f32  per-pixel [y, x] interleaved along w
    e_ref:     (2*Wt, Wt*dim)  bf16/f32  constant 0/1 block-diagonal expansion
    freq_ref:  (1, Wt*dim)     f32       per-output-column freq (1/max folded in)
    phase_ref: (1, Wt*dim)     f32       alternating 0 / pi/2 (cos == shifted sin)
    o_ref:     (Rt, Wt*dim)    f32
    """
    # (Rt,2Wt)@(2Wt,Wt*dim) on the MXU.  E is 0/1 and the cumsum values are
    # small integers (exact in bf16 for H,W <= 256), so this is an exact
    # broadcast of the per-pixel y/x offsets into the lane-dense column layout.
    expanded = jnp.dot(yx_ref[...], e_ref[...], preferred_element_type=jnp.float32)
    # One fma + one sin per output element; the (1, Wt*dim) freq/phase rows
    # broadcast over sublanes inside the VPU op (free — no materialization).
    o_ref[...] = jnp.sin(expanded * freq_ref[...] + phase_ref[...])


def _pick_w_tile(W, dim, max_cols=16384):
    """Largest divisor Wt of W such that both the yx block (lane = 2*Wt) and the
    output block (lane = Wt*dim) are 128-aligned (or full-width), with the
    output tile's column count bounded."""
    valid = []
    for wt in range(1, W + 1):
        if W % wt:
            continue
        lane_ok = ((wt * dim) % 128 == 0) and ((2 * wt) % 128 == 0)
        if lane_ok or wt == W:
            valid.append(wt)
    fitting = [wt for wt in valid if wt * dim <= max_cols]
    return max(fitting) if fitting else min(valid)


def _pick_row_tile(M, sub, out_row_bytes, n_w_tiles, target_bytes=8 << 20):
    """Largest divisor Rt of M that satisfies the sublane constraint, keeps the
    f32 output block under ~8 MiB, and (when the W axis alone gives < 2 grid
    steps) still yields >= 2 grid steps so both v7x TensorCores get work."""
    valid = [rt for rt in range(1, M + 1)
             if M % rt == 0 and (rt % sub == 0 or rt == M)]
    fitting = [rt for rt in valid if rt * out_row_bytes <= target_bytes]
    cands = fitting if fitting else [min(valid)]
    if n_w_tiles < 2:
        two_step = [rt for rt in cands if M // rt >= 2]
        if two_step:
            return max(two_step)
    return max(cands)


def sine_positional_encoding(mask, dim=32, scale=2.0 * math.pi,
                             row_block=None, w_block=None):
    """Pallas port of SinePositionalEncoding.forward.

    mask: (B, H, W) bool / int (True = padded).  Returns (B, H, W, dim) float32.
    """
    assert dim % 4 == 0, "dim must be divisible by 4 (dim//2 must be even)"
    B, H, W = mask.shape
    S = dim // 2          # per-axis embedding width (SineTransform dim)
    half = S // 2         # number of logspace frequencies
    M = B * H             # batch folded into the matmul M dimension

    not_mask = 1 - mask.astype(jnp.int32)
    y = jnp.cumsum(not_mask, axis=1, dtype=jnp.float32)      # (B, H, W)
    x = jnp.cumsum(not_mask, axis=2, dtype=jnp.float32)      # (B, H, W)

    # Global maxes, exactly matching torch's y.max()/x.max().  No eps: a fully
    # padded batch yields NaNs, same as the PyTorch module.
    y_max = jnp.max(y)
    x_max = jnp.max(x)

    # Per-w interleave: column 2w -> y[...,w], 2w+1 -> x[...,w].  This makes the
    # expansion matrix block-diagonal with IDENTICAL (2, dim) blocks, so the
    # kernel only ever needs a constant (2*Wt, Wt*dim) tile of it.
    yx = jnp.stack([y, x], axis=-1).reshape(M, 2 * W)         # (M, 2W) f32

    # bf16 matmul operands are exact while the raw cumsum integers are <= 256.
    use_bf16 = (H <= 256) and (W <= 256)
    op_dtype = jnp.bfloat16 if use_bf16 else jnp.float32
    yx = yx.astype(op_dtype)

    # ---- tile selection -------------------------------------------------
    if w_block is None:
        w_block = _pick_w_tile(W, dim)
    assert W % w_block == 0, "w_block must divide W"
    wd_t = w_block * dim
    n_w = W // w_block

    sub = 16 if use_bf16 else 8            # sublane packing of the yx operand
    if row_block is None:
        row_block = _pick_row_tile(M, sub, wd_t * 4, n_w)
    assert M % row_block == 0, "row_block must divide B*H"
    n_rows = M // row_block

    # ---- constant operands (identical for every W tile) ------------------
    # torch.logspace(start=1, end=-4, steps=half, base=scale) == scale ** linspace(1,-4)
    logspace = (scale ** jnp.linspace(1.0, -4.0, half)).astype(jnp.float32)
    lrep = jnp.repeat(logspace, 2)                            # (S,), lrep[2k]==lrep[2k+1]

    # Fold 1/max into the per-channel frequency; tile per flattened output column.
    freq_dim = jnp.concatenate([lrep / y_max, lrep / x_max])            # (dim,)
    freq_tile = jnp.tile(freq_dim, w_block)[None, :].astype(jnp.float32)  # (1, Wt*dim)

    # cos(t) == sin(t + pi/2): single-sin interleave via a phase vector.
    phase_dim = jnp.tile(jnp.array([0.0, 0.5 * math.pi], jnp.float32), dim // 2)
    phase_tile = jnp.tile(phase_dim, w_block)[None, :]                    # (1, Wt*dim)

    # 0/1 block-diagonal expansion tile: within each w, column c takes the y
    # offset (row 2w) for c < S and the x offset (row 2w+1) for c >= S.
    c = jnp.arange(dim)
    e_blk = jnp.stack([(c < S), (c >= S)], axis=0).astype(jnp.float32)    # (2, dim)
    expand = jnp.kron(jnp.eye(w_block, dtype=jnp.float32), e_blk).astype(op_dtype)
    # -> (2*Wt, Wt*dim), constant across both grid axes.

    # ---- VMEM budget & cost estimate -------------------------------------
    in_bytes = 2 if use_bf16 else 4
    vmem_bytes = (2 * row_block * 2 * w_block * in_bytes      # yx (double-buffered)
                  + 2 * (2 * w_block) * wd_t * in_bytes       # E
                  + 2 * 2 * wd_t * 4                          # freq + phase
                  + 2 * row_block * wd_t * 4)                 # output
    # TODO(synk): pipeline_mode=pl.Buffered(1) on the constant-index inputs
    # would drop their second buffer once single-buffering is supported here.
    vmem_limit = int(min(max(2 * vmem_bytes, 16 << 20), 64 << 20))

    cost = pl.CostEstimate(
        flops=int(2 * M * (2 * w_block) * (W * dim) + 2 * M * W * dim),
        transcendentals=int(M * W * dim),
        bytes_accessed=int(M * 2 * W * in_bytes
                           + 2 * w_block * wd_t * in_bytes
                           + 2 * wd_t * 4
                           + M * W * dim * 4),
    )

    out_flat = pl.pallas_call(
        _sine_pos_kernel,
        out_shape=jax.ShapeDtypeStruct((M, W * dim), jnp.float32),
        grid=(n_rows, n_w),
        in_specs=[
            pl.BlockSpec((row_block, 2 * w_block), lambda ri, wi: (ri, wi)),  # yx
            pl.BlockSpec((2 * w_block, wd_t), lambda ri, wi: (0, 0)),         # E tile
            pl.BlockSpec((1, wd_t), lambda ri, wi: (0, 0)),                   # freqs
            pl.BlockSpec((1, wd_t), lambda ri, wi: (0, 0)),                   # phases
        ],
        out_specs=pl.BlockSpec((row_block, wd_t), lambda ri, wi: (ri, wi)),
        compiler_params=pltpu.CompilerParams(
            dimension_semantics=("parallel", "parallel"),
            vmem_limit_bytes=vmem_limit),
        cost_estimate=cost,
    )(yx, expand, freq_tile, phase_tile)

    # Row-major contiguous: free reshape back to channels-last (B, H, W, dim).
    # TODO(synk): on v5e, emitting bf16 output would halve the store-bound time
    # if downstream accepts it; kept f32 here for parity with the PyTorch module.
    return out_flat.reshape(B, H, W, dim)


def _reference_jax(mask, dim=32, scale=2.0 * math.pi):
    """Pure-JAX transcription of the PyTorch module (for correctness check)."""
    S = dim // 2
    half = S // 2
    not_mask = 1 - mask.astype(jnp.int32)
    y = jnp.cumsum(not_mask, axis=1, dtype=jnp.float32)
    x = jnp.cumsum(not_mask, axis=2, dtype=jnp.float32)
    logspace = (scale ** jnp.linspace(1.0, -4.0, half)).astype(jnp.float32)

    def sine_transform(off):
        pos = off[..., None] * logspace                       # (..., half)
        z = jnp.stack([jnp.sin(pos), jnp.cos(pos)], axis=-1)  # (..., half, 2)
        return z.reshape(*z.shape[:-2], -1)                   # (..., S)

    pos_y = sine_transform(y / jnp.max(y))
    pos_x = sine_transform(x / jnp.max(x))
    return jnp.concatenate([pos_y, pos_x], axis=-1)


if __name__ == "__main__":
    B, H, W, DIM = 2, 16, 16, 32

    key = jax.random.PRNGKey(0)
    # DETR-style padding mask: True = padded location.
    mask = jax.random.bernoulli(key, p=0.3, shape=(B, H, W))

    out = sine_positional_encoding(mask, dim=DIM)
    out = jax.block_until_ready(out)

    ref = _reference_jax(mask, dim=DIM)
    assert out.shape == (B, H, W, DIM), out.shape
    assert out.dtype == jnp.float32
    assert jnp.max(jnp.abs(out - ref)) < 1e-5

    print("KERNEL_OK")
</pallas_src>

<mosaic_0001>
module attributes {stable_mosaic.version = 11 : i64} {
  func.func @_sine_pos_kernel(%arg0: i32, %arg1: i32, %arg2: memref<16x32xbf16, #tpu.memory_space<vmem>>, %arg3: memref<32x512xbf16, #tpu.memory_space<vmem>>, %arg4: memref<1x512xf32, #tpu.memory_space<vmem>>, %arg5: memref<1x512xf32, #tpu.memory_space<vmem>>, %arg6: memref<16x512xf32, #tpu.memory_space<vmem>>) attributes {dimension_semantics = [#tpu.dimension_semantics<parallel>, #tpu.dimension_semantics<parallel>], iteration_bounds = array<i64: 2, 1>, scalar_prefetch = 0 : i64, scratch_operands = 0 : i64, tpu.core_type = #tpu.core_type<tc>, window_params = [{transform_indices = @transform_0, window_bounds = array<i64: 16, 32>}, {pipeline_mode = #tpu.pipeline_mode<synchronous>, transform_indices = @transform_1, window_bounds = array<i64: 32, 512>}, {pipeline_mode = #tpu.pipeline_mode<synchronous>, transform_indices = @transform_2, window_bounds = array<i64: 1, 512>}, {pipeline_mode = #tpu.pipeline_mode<synchronous>, transform_indices = @transform_3, window_bounds = array<i64: 1, 512>}, {transform_indices = @transform_4, window_bounds = array<i64: 16, 512>}]} {
    %c0 = arith.constant 0 : index
    %c0_0 = arith.constant 0 : index
    %0 = vector.load %arg2[%c0, %c0_0] : memref<16x32xbf16, #tpu.memory_space<vmem>>, vector<16x32xbf16>
    %c0_1 = arith.constant 0 : index
    %c0_2 = arith.constant 0 : index
    %1 = vector.load %arg3[%c0_1, %c0_2] : memref<32x512xbf16, #tpu.memory_space<vmem>>, vector<32x512xbf16>
    %cst = arith.constant dense<0.000000e+00> : vector<16x512xf32>
    %2 = tpu.matmul %0, %1, %cst {dimension_numbers = #tpu.dot_dimension_numbers<[1], [0], [0], [1], [0, 0, 1, 1], [], []>} : vector<16x32xbf16>, vector<32x512xbf16>, vector<16x512xf32> -> vector<16x512xf32>
    %c0_3 = arith.constant 0 : index
    %c0_4 = arith.constant 0 : index
    %3 = vector.load %arg4[%c0_3, %c0_4] : memref<1x512xf32, #tpu.memory_space<vmem>>, vector<1x512xf32>
    %4 = vector.broadcast %3 : vector<1x512xf32> to vector<16x512xf32>
    %5 = arith.mulf %2, %4 : vector<16x512xf32>
    %c0_5 = arith.constant 0 : index
    %c0_6 = arith.constant 0 : index
    %6 = vector.load %arg5[%c0_5, %c0_6] : memref<1x512xf32, #tpu.memory_space<vmem>>, vector<1x512xf32>
    %7 = vector.broadcast %6 : vector<1x512xf32> to vector<16x512xf32>
    %8 = arith.addf %5, %7 : vector<16x512xf32>
    %9 = math.sin %8 : vector<16x512xf32>
    %c0_7 = arith.constant 0 : index
    %c0_8 = arith.constant 0 : index
    %10 = vector.load %arg6[%c0_7, %c0_8] : memref<16x512xf32, #tpu.memory_space<vmem>>, vector<16x512xf32>
    tpu.vector_store %arg6[%c0_7, %c0_8], %9 {strides = array<i32>} : memref<16x512xf32, #tpu.memory_space<vmem>>, vector<16x512xf32>,
    return
  }
  func.func @transform_0(%arg0: i32, %arg1: i32) -> (i32, i32) {
    %c0_i32 = arith.constant 0 : i32
    return %arg0, %arg1 : i32, i32
  }
  func.func @transform_1(%arg0: i32, %arg1: i32) -> (i32, i32) {
    %c0_i32 = arith.constant 0 : i32
    %c0_i32_0 = arith.constant 0 : i32
    %c0_i32_1 = arith.constant 0 : i32
    return %c0_i32, %c0_i32_0 : i32, i32
  }
  func.func @transform_2(%arg0: i32, %arg1: i32) -> (i32, i32) {
    %c0_i32 = arith.constant 0 : i32
    %c0_i32_0 = arith.constant 0 : i32
    %c0_i32_1 = arith.constant 0 : i32
    return %c0_i32, %c0_i32_0 : i32, i32
  }
  func.func @transform_3(%arg0: i32, %arg1: i32) -> (i32, i32) {
    %c0_i32 = arith.constant 0 : i32
    %c0_i32_0 = arith.constant 0 : i32
    %c0_i32_1 = arith.constant 0 : i32
    return %c0_i32, %c0_i32_0 : i32, i32
  }
  func.func @transform_4(%arg0: i32, %arg1: i32) -> (i32, i32) {
    %c0_i32 = arith.constant 0 : i32
    return %arg0, %arg1 : i32, i32
  }
}

</mosaic_0001>

<llo_original>
// kernel: tpu_custom_call.1
$region0: #{tpu_custom_call.1}
  #allocation0 [shape = 'u32[]', space=smem, size = 0x4, offset = 0x4, fixed_abs, tag = 'smem constant byte address 0x4 - core index']
  #allocation1 [shape = 'u32[72,128]{1,0:T(1,128)}', space=vmem, size = 0x9000, scoped, tag = 'internal scratch']
  %s0 = inlined_call_operand.hbm [shape: bf16[32,32], index: 0, kind: input, shape index: {}]
  %s1 = inlined_call_operand.hbm [shape: bf16[32,512], index: 1, kind: input, shape index: {}]
  %s2 = inlined_call_operand.hbm [shape: f32[1,512], index: 2, kind: input, shape index: {}]
  %s3 = inlined_call_operand.hbm [shape: f32[1,512], index: 3, kind: input, shape index: {}]
  %s4 = inlined_call_operand.hbm [shape: f32[32,512], index: 4, kind: output, shape index: {}]
  %s5 = sld [smem:[#allocation0]]
  $region65: #{tpu_custom_call.1} parent=0
    _
  %s7 = ssub.s32 1, %s5
  %s8 = scalar_select 0, %s7, %s5
  $region1: #{tpu_custom_call.1} parent=0
    #allocation2 [shape = 'u8[8192]{0}', space=vmem, size = 0x2000, scoped, tag = 'input window, operand 0']
    #allocation3 [shape = 's32[2]{0}', space=sflag, size = 0x8, scoped, tag = 'scoped memory for tpu_custom_call.1']
    #allocation4 [shape = 's32[2]{0}', space=sflag, size = 0x8, scoped, tag = 'scoped memory for tpu_custom_call.1']
    #allocation5 [shape = 'u8[32768]{0}', space=vmem, size = 0x8000, scoped, tag = 'input window, operand 1, single buffered']
    #allocation6 [shape = 's32[1]{0}', space=sflag, size = 0x4, scoped, tag = 'scoped memory for tpu_custom_call.1']
    #allocation7 [shape = 'u8[2048]{0}', space=vmem, size = 0x800, scoped, tag = 'input window, operand 2, single buffered']
    #allocation8 [shape = 'u8[2048]{0}', space=vmem, size = 0x800, scoped, tag = 'input window, operand 3, single buffered']
    #allocation9 [shape = 's32[1]{0}', space=sflag, size = 0x4, scoped, tag = 'scoped memory for tpu_custom_call.1']
    #allocation10 [shape = 'u8[65536]{0}', space=vmem, size = 0x10000, scoped, tag = 'output window, operand 0']
    %9 = vsyncpa [#allocation3], 0
    %s10 = scalar_lea.sflag [#allocation3], 1
    %11 = vsyncpa %s10, 0
    %12 = vsyncpa [#allocation6], 0
    %13 = vsyncpa [#allocation9], 0
    %14 = vsyncpa [#allocation4], 0
    %s15 = scalar_lea.sflag [#allocation4], 1
    %16 = vsyncpa %s15, 0
    loop: start=0, step=1, limit=4
    $region2: #{tpu_custom_call.1} parent=1 // loop_pre_header
      _
    $region3: #{tpu_custom_call.1} parent=1 // loop_header
      %s18 = sphi 0, %s22
      %p19 = scmp.ge.s32.totalorder %s18, 4
      %s25 = sphi 0, %s37
      %s26 = sphi 0, %s33
      %s27 = sphi 0, %s25
      %s28 = sphi 0, %s26
      %s29 = sphi 0, %s27
      %s30 = sphi 0, %s28
      %s42 = sphi 0, %s44
      %s45 = sphi 0, %s42
      %s46 = sphi 0, %s45
      %s62 = sphi 0, %s46
      %s66 = sphi 0, %s66
      %s68 = sphi 0, %s66
      %s69 = sphi 0, %s68
      %s83 = sphi 0, %s69
      %s87 = sphi 0, %s87
      %s89 = sphi 0, %s87
      %s90 = sphi 0, %s89
      %s104 = sphi 0, %s90
      %s108 = sphi 0, %s108
      %s110 = sphi 0, %s108
      %s111 = sphi 0, %s110
      %s125 = sphi 0, %s111
      %s133 = sphi 0, %s135
      %s136 = sphi 0, %s133
      %s137 = sphi 0, %s136
      %s153 = sphi 0, %s137
    $region4: #{tpu_custom_call.1} parent=1 // loop_header_branch
      %21 = sbr.rel (%p19) target = $region8
    $region5: #{tpu_custom_call.1} parent=1 // loop_body
      %s23 = ssub.s32 %s18, 1
      %s24 = ssub.s32 %s18, 2
      %s31 = sadd.s32 1, %s26
      %p32 = scmp.ge.s32.totalorder %s31, 1
      %s33 = scalar_select %p32, 0, %s31
      %s34 = sadd.s32 1, %s25
      %s35 = scalar_select %p32, %s34, %s25
      %p36 = scmp.ge.s32.totalorder %s35, 2
      %s37 = scalar_select %p36, 0, %s35
      %s38 = ssub.s32 %s25, %s37
      %s39 = ssub.s32 %s26, %s33
      %s40 = sor.u32 %s38, %s39
      %p41 = scmp.eq.s32.totalorder %s40, 0
      %s43 = sadd.s32 %s42, 1
      %s44 = scalar_select %p41, %s42, %s43
      %p47 = pneg %p41
      %p48 = scmp.eq.s32.totalorder %s18, 1
      %p49 = por %p47, %p48
      %p50 = scmp.ne.s32.totalorder %s42, %s45
      %p51 = scmp.eq.s32.totalorder %s18, 0
      %p52 = por %p50, %p51
      %p53 = scmp.ne.s32.totalorder %s42, %s45
      %p54 = scmp.eq.s32.totalorder %s23, 1
      %p55 = por %p53, %p54
      %p56 = scmp.ne.s32.totalorder %s45, %s46
      %p57 = scmp.eq.s32.totalorder %s23, 0
      %p58 = por %p56, %p57
      %p59 = scmp.ne.s32.totalorder %s45, %s46
      %p60 = scmp.eq.s32.totalorder %s24, 1
      %p61 = por %p59, %p60
      %p63 = scmp.ne.s32.totalorder %s46, %s62
      %p64 = scmp.eq.s32.totalorder %s24, 0
      %p65 = por %p63, %p64
      %s67 = sadd.s32 %s66, 1
      %p70 = scmp.eq.s32.totalorder %s18, 1
      %p71 = scmp.ne.s32.totalorder %s66, %s68
      %p72 = scmp.eq.s32.totalorder %s18, 0
      %p73 = por %p71, %p72
      %p74 = scmp.ne.s32.totalorder %s66, %s68
      %p75 = scmp.eq.s32.totalorder %s23, 1
      %p76 = por %p74, %p75
      %p77 = scmp.ne.s32.totalorder %s68, %s69
      %p78 = scmp.eq.s32.totalorder %s23, 0
      %p79 = por %p77, %p78
      %p80 = scmp.ne.s32.totalorder %s68, %s69
      %p81 = scmp.eq.s32.totalorder %s24, 1
      %p82 = por %p80, %p81
      %p84 = scmp.ne.s32.totalorder %s69, %s83
      %p85 = scmp.eq.s32.totalorder %s24, 0
      %p86 = por %p84, %p85
      %s88 = sadd.s32 %s87, 1
      %p91 = scmp.eq.s32.totalorder %s18, 1
      %p92 = scmp.ne.s32.totalorder %s87, %s89
      %p93 = scmp.eq.s32.totalorder %s18, 0
      %p94 = por %p92, %p93
      %p95 = scmp.ne.s32.totalorder %s87, %s89
      %p96 = scmp.eq.s32.totalorder %s23, 1
      %p97 = por %p95, %p96
      %p98 = scmp.ne.s32.totalorder %s89, %s90
      %p99 = scmp.eq.s32.totalorder %s23, 0
      %p100 = por %p98, %p99
      %p101 = scmp.ne.s32.totalorder %s89, %s90
      %p102 = scmp.eq.s32.totalorder %s24, 1
      %p103 = por %p101, %p102
      %p105 = scmp.ne.s32.totalorder %s90, %s104
      %p106 = scmp.eq.s32.totalorder %s24, 0
      %p107 = por %p105, %p106
      %s109 = sadd.s32 %s108, 1
      %p112 = scmp.eq.s32.totalorder %s18, 1
      %p113 = scmp.ne.s32.totalorder %s108, %s110
      %p114 = scmp.eq.s32.totalorder %s18, 0
      %p115 = por %p113, %p114
      %p116 = scmp.ne.s32.totalorder %s108, %s110
      %p117 = scmp.eq.s32.totalorder %s23, 1
      %p118 = por %p116, %p117
      %p119 = scmp.ne.s32.totalorder %s110, %s111
      %p120 = scmp.eq.s32.totalorder %s23, 0
      %p121 = por %p119, %p120
      %p122 = scmp.ne.s32.totalorder %s110, %s111
      %p123 = scmp.eq.s32.totalorder %s24, 1
      %p124 = por %p122, %p123
      %p126 = scmp.ne.s32.totalorder %s111, %s125
      %p127 = scmp.eq.s32.totalorder %s24, 0
      %p128 = por %p126, %p127
      %s129 = ssub.s32 %s25, %s37
      %s130 = ssub.s32 %s26, %s33
      %s131 = sor.u32 %s129, %s130
      %p132 = scmp.eq.s32.totalorder %s131, 0
      %s134 = sadd.s32 %s133, 1
      %s135 = scalar_select %p132, %s133, %s134
      %p138 = pneg %p132
      %p139 = scmp.eq.s32.totalorder %s18, 1
      %p140 = por %p138, %p139
      %p141 = scmp.ne.s32.totalorder %s133, %s136
      %p142 = scmp.eq.s32.totalorder %s18, 0
      %p143 = por %p141, %p142
      %p144 = scmp.ne.s32.totalorder %s133, %s136
      %p145 = scmp.eq.s32.totalorder %s23, 1
      %p146 = por %p144, %p145
      %p147 = scmp.ne.s32.totalorder %s136, %s137
      %p148 = scmp.eq.s32.totalorder %s23, 0
      %p149 = por %p147, %p148
      %p150 = scmp.ne.s32.totalorder %s136, %s137
      %p151 = scmp.eq.s32.totalorder %s24, 1
      %p152 = por %p150, %p151
      %p154 = scmp.ne.s32.totalorder %s137, %s153
      %p155 = scmp.eq.s32.totalorder %s24, 0
      %p156 = por %p154, %p155
      %p157 = scmp.le.s32.totalorder 1, %s18
      %p158 = scmp.lt.s32.totalorder %s18, 3
      %p159 = pnand %p157, %p158
      %p160 = pneg %p159
      // Predicated region
      $region9: #{tpu_custom_call.1} parent=5 // pred_check
        _
      $region10: #{tpu_custom_call.1} parent=5 // pred_check_branch
        %162 = sbr.rel (%p159) target = $region12
      $region11: #{tpu_custom_call.1} parent=5 // pred_region
        %s163 = ssub.s32 %s18, 1
        // Predicated region
        $region13: #{tpu_custom_call.1} parent=11 // pred_check
          %p164 = pneg %p79
        $region14: #{tpu_custom_call.1} parent=11 // pred_check_branch
          %166 = sbr.rel (%p164) target = $region16
        $region15: #{tpu_custom_call.1} parent=11 // pred_region
          %168 = vsyncadd [#allocation6], 0
          %s169 = sshll.u32 %s1, 4
          %s170 = int_to_ptr.hbm [resolvable:$true] %s169
          %s171 = sshll.u32 [#allocation5], 4
          %s172 = int_to_ptr.vmem [resolvable:$true] %s171
          %177 = dma.hbm_to_vmem [thread:$0]  %s170, 1024, %s172, [#allocation6], 256, 256, 16
        $region16: #{tpu_custom_call.1} parent=11 // pred_fallthru
          _
        // Predicated region
        $region17: #{tpu_custom_call.1} parent=11 // pred_check
          %p178 = pneg %p100
        $region18: #{tpu_custom_call.1} parent=11 // pred_check_branch
          %180 = sbr.rel (%p178) target = $region20
        $region19: #{tpu_custom_call.1} parent=11 // pred_region
          %182 = vsyncadd [#allocation6], 0
          %s184 = sshll.u32 %s2, 4
          %s185 = int_to_ptr.hbm [resolvable:$true] %s184
          %s186 = sshll.u32 [#allocation7], 4
          %s187 = int_to_ptr.vmem [resolvable:$true] %s186
          %189 = dma.hbm_to_vmem [thread:$0]  %s185, 64, %s187, [#allocation6]
        $region20: #{tpu_custom_call.1} parent=11 // pred_fallthru
          _
        // Predicated region
        $region21: #{tpu_custom_call.1} parent=11 // pred_check
          %p190 = pneg %p121
        $region22: #{tpu_custom_call.1} parent=11 // pred_check_branch
          %192 = sbr.rel (%p190) target = $region24
        $region23: #{tpu_custom_call.1} parent=11 // pred_region
          %194 = vsyncadd [#allocation9], 0
          %s196 = sshll.u32 %s3, 4
          %s197 = int_to_ptr.hbm [resolvable:$true] %s196
          %s198 = sshll.u32 [#allocation8], 4
          %s199 = int_to_ptr.vmem [resolvable:$true] %s198
          %201 = dma.hbm_to_vmem [thread:$0]  %s197, 64, %s199, [#allocation9]
        $region24: #{tpu_custom_call.1} parent=11 // pred_fallthru
          _
      $region12: #{tpu_custom_call.1} parent=5 // pred_fallthru
        _
      %p202 = scmp.lt.s32.totalorder %s18, 2
      // Predicated region
      $region25: #{tpu_custom_call.1} parent=5 // pred_check
        %p203 = pneg %p202
      $region26: #{tpu_custom_call.1} parent=5 // pred_check_branch
        %205 = sbr.rel (%p203) target = $region28
      $region27: #{tpu_custom_call.1} parent=5 // pred_region
        // Predicated region
        $region29: #{tpu_custom_call.1} parent=27 // pred_check
          %p206 = pneg %p52
        $region30: #{tpu_custom_call.1} parent=27 // pred_check_branch
          %208 = sbr.rel (%p206) target = $region32
        $region31: #{tpu_custom_call.1} parent=27 // pred_region
          %s209 = sand.u32 %s42, 1
          %s210 = scalar_lea.sflag [#allocation3], %s209
          %s211 = sand.u32 %s42, 1
          %s212 = smul.addr %s211, 8
          %s213 = scalar_lea.vmem [#allocation2], %s212
          %s214 = smul.u32 2, %s25
          %216 = vsyncadd %s210, 0
          %s217 = sadd.s32 %s26, %s214
          %s218 = smul.addr %s217, 4
          %s219 = scalar_lea.hbm %s0, %s218
          %s220 = sshll.u32 %s219, 4
          %s221 = int_to_ptr.hbm [resolvable:$true] %s220
          %s222 = sshll.u32 %s213, 4
          %s223 = int_to_ptr.vmem [resolvable:$true] %s222
          %228 = dma.hbm_to_vmem [thread:$0]  %s221, 128, %s223, %s210, 64, 64, 4
        $region32: #{tpu_custom_call.1} parent=27 // pred_fallthru
          _
      $region28: #{tpu_custom_call.1} parent=5 // pred_fallthru
        _
      %p229 = scmp.le.s32.totalorder 1, %s18
      %p230 = scmp.lt.s32.totalorder %s18, 3
      %p231 = pnand %p229, %p230
      %p232 = pneg %p231
      // Predicated region
      $region33: #{tpu_custom_call.1} parent=5 // pred_check
        _
      $region34: #{tpu_custom_call.1} parent=5 // pred_check_branch
        %234 = sbr.rel (%p231) target = $region36
      $region35: #{tpu_custom_call.1} parent=5 // pred_region
        %s235 = ssub.s32 %s18, 1
        %s236 = sand.u32 %s45, 1
        %s237 = scalar_lea.sflag [#allocation3], %s236
        %s238 = sand.u32 %s45, 1
        %s239 = smul.addr %s238, 8
        %s240 = scalar_lea.vmem [#allocation2], %s239
        // Predicated region
        $region37: #{tpu_custom_call.1} parent=35 // pred_check
          %p241 = pneg %p58
        $region38: #{tpu_custom_call.1} parent=35 // pred_check_branch
          %243 = sbr.rel (%p241) target = $region40
        $region39: #{tpu_custom_call.1} parent=35 // pred_region
          %245 = dma.done %s237, 128
        $region40: #{tpu_custom_call.1} parent=35 // pred_fallthru
          _
        // Predicated region
        $region41: #{tpu_custom_call.1} parent=35 // pred_check
          %p246 = pneg %p79
        $region42: #{tpu_custom_call.1} parent=35 // pred_check_branch
          %248 = sbr.rel (%p246) target = $region44
        $region43: #{tpu_custom_call.1} parent=35 // pred_region
          %250 = dma.done [#allocation6], 1024
        $region44: #{tpu_custom_call.1} parent=35 // pred_fallthru
          _
        // Predicated region
        $region45: #{tpu_custom_call.1} parent=35 // pred_check
          %p251 = pneg %p100
        $region46: #{tpu_custom_call.1} parent=35 // pred_check_branch
          %253 = sbr.rel (%p251) target = $region48
        $region47: #{tpu_custom_call.1} parent=35 // pred_region
          %255 = dma.done [#allocation6], 64
        $region48: #{tpu_custom_call.1} parent=35 // pred_fallthru
          _
        // Predicated region
        $region49: #{tpu_custom_call.1} parent=35 // pred_check
          %p256 = pneg %p121
        $region50: #{tpu_custom_call.1} parent=35 // pred_check_branch
          %258 = sbr.rel (%p256) target = $region52
        $region51: #{tpu_custom_call.1} parent=35 // pred_region
          %260 = dma.done [#allocation9], 64
        $region52: #{tpu_custom_call.1} parent=35 // pred_fallthru
          _
        %s261 = sand.u32 %s45, 1
        %s262 = scalar_lea.sflag [#allocation3], %s261
        %s263 = sand.u32 %s45, 1
        %s264 = smul.addr %s263, 8
        %s265 = scalar_lea.vmem [#allocation2], %s264
        %p266 = pneg %p58
        %p267 = pneg %p55
        %p268 = pneg %p79
        %p269 = pneg %p76
        %p270 = pneg %p100
        %p271 = pneg %p97
        %p272 = pneg %p121
        %p273 = pneg %p118
        %p274 = pneg %p149
        %p275 = pneg %p146
        %s276 = sand.u32 %s136, 1
        %s277 = scalar_lea.sflag [#allocation4], %s276
        %s278 = sand.u32 %s136, 1
        %s279 = smul.addr %s278, 64
        %s280 = scalar_lea.vmem [#allocation10], %s279
        %s281 = smul.u32 2, %s27
        %s282 = smul.u32 2, %s27
        %s283 = smul.u32 4, %s28
        %v285 = vld [vmem:[%s240] sm:$0xf]
        %v286 = vld [vmem:[%s240 + $0x4] sm:$0xf]
        %v287 = vld [vmem:[#allocation5] sm:$0xff]
        %v288 = vld [vmem:[#allocation5 + $0x8] sm:$0xff]
        %v289 = vld [vmem:[#allocation5 + $0x10] sm:$0xff]
        %v290 = vld [vmem:[#allocation5 + $0x18] sm:$0xff]
        %v291 = vld [vmem:[#allocation5 + $0x20] sm:$0xff]
        %v292 = vld [vmem:[#allocation5 + $0x28] sm:$0xff]
        %v293 = vld [vmem:[#allocation5 + $0x30] sm:$0xff]
        %v294 = vld [vmem:[#allocation5 + $0x38] sm:$0xff]
        %v297 = vunpack.c.l.b16 %v285
        %v298 = vunpack.c.l.b16 %v286
        %v299 = vpack.c.b16 %v298, %v297
        %v308 = vunpack.c.l.b16 %v287
        %v309 = vunpack.c.h.b16 %v287
        %v310 = vunpack.c.l.b16 %v288
        %v311 = vunpack.c.h.b16 %v288
        %v312 = vunpack.c.l.b16 %v289
        %v313 = vunpack.c.h.b16 %v289
        %v314 = vunpack.c.l.b16 %v290
        %v315 = vunpack.c.h.b16 %v290
        %v316 = vunpack.c.l.b16 %v291
        %v317 = vunpack.c.h.b16 %v291
        %v318 = vunpack.c.l.b16 %v292
        %v319 = vunpack.c.h.b16 %v292
        %v320 = vunpack.c.l.b16 %v293
        %v321 = vunpack.c.h.b16 %v293
        %v322 = vunpack.c.l.b16 %v294
        %v323 = vunpack.c.h.b16 %v294
        %v324 = vpack.c.b16 %v312, %v308
        %v325 = vpack.c.b16 %v313, %v309
        %v326 = vpack.c.b16 %v314, %v310
        %v327 = vpack.c.b16 %v315, %v311
        %v328 = vpack.c.b16 %v320, %v316
        %v329 = vpack.c.b16 %v321, %v317
        %v330 = vpack.c.b16 %v322, %v318
        %v331 = vpack.c.b16 %v323, %v319
        %vm340 = vcmask 261120
        %v342 = vsel %vm340, %v299, 0
        %344 = vmatpush.bf16.msra.mxu0 0
        %345 = vmatpush.bf16.msra.mxu0 0
        %346 = vmatpush.bf16.msra.mxu0 0
        %347 = vmatpush.bf16.msra.mxu0 0
        %348 = vmatpush.bf16.msra.mxu0 0
        %349 = vmatpush.bf16.msra.mxu0 0
        %350 = vmatpush.bf16.msra.mxu0 %v328
        %351 = vmatpush.bf16.msra.mxu0 %v324
        %352 = vmatmul.bf16.gmra.mxu0 %v342
        %v353 = vpop.f32.mrf.mxu0
        %v354 = vadd.f32 0.0, %v353
        %v355 = vpop.f32.mrf.mxu0
        %v356 = vadd.f32 0.0, %v355
        %357 = vdwg.mxu0
        %358 = vmatpush.bf16.msra.mxu0 0
        %359 = vmatpush.bf16.msra.mxu0 0
        %360 = vmatpush.bf16.msra.mxu0 0
        %361 = vmatpush.bf16.msra.mxu0 0
        %362 = vmatpush.bf16.msra.mxu0 0
        %363 = vmatpush.bf16.msra.mxu0 0
        %364 = vmatpush.bf16.msra.mxu0 %v329
        %365 = vmatpush.bf16.msra.mxu0 %v325
        %366 = vmatmul.bf16.gmra.mxu0 %v342
        %v367 = vpop.f32.mrf.mxu0
        %v368 = vadd.f32 0.0, %v367
        %v369 = vpop.f32.mrf.mxu0
        %v370 = vadd.f32 0.0, %v369
        %371 = vdwg.mxu0
        %372 = vmatpush.bf16.msra.mxu0 0
        %373 = vmatpush.bf16.msra.mxu0 0
        %374 = vmatpush.bf16.msra.mxu0 0
        %375 = vmatpush.bf16.msra.mxu0 0
        %376 = vmatpush.bf16.msra.mxu0 0
        %377 = vmatpush.bf16.msra.mxu0 0
        %378 = vmatpush.bf16.msra.mxu0 %v330
        %379 = vmatpush.bf16.msra.mxu0 %v326
        %380 = vmatmul.bf16.gmra.mxu0 %v342
        %v381 = vpop.f32.mrf.mxu0
        %v382 = vadd.f32 0.0, %v381
        %v383 = vpop.f32.mrf.mxu0
        %v384 = vadd.f32 0.0, %v383
        %385 = vdwg.mxu0
        %386 = vmatpush.bf16.msra.mxu0 0
        %387 = vmatpush.bf16.msra.mxu0 0
        %388 = vmatpush.bf16.msra.mxu0 0
        %389 = vmatpush.bf16.msra.mxu0 0
        %390 = vmatpush.bf16.msra.mxu0 0
        %391 = vmatpush.bf16.msra.mxu0 0
        %392 = vmatpush.bf16.msra.mxu0 %v331
        %393 = vmatpush.bf16.msra.mxu0 %v327
        %394 = vmatmul.bf16.gmra.mxu0 %v342
        %v395 = vpop.f32.mrf.mxu0
        %v396 = vadd.f32 0.0, %v395
        %v397 = vpop.f32.mrf.mxu0
        %v398 = vadd.f32 0.0, %v397
        %399 = vdwg.mxu0
        %v400 = vld [vmem:[#allocation7] sm:$0xf]
        %v402 = vperm.slane %v400, 0
        %v403 = vperm.slane %v400, 1
        %v404 = vperm.slane %v400, 2
        %v405 = vperm.slane %v400, 3
        %v410 = vmul.f32 %v354, %v402
        %v411 = vmul.f32 %v368, %v403
        %v412 = vmul.f32 %v382, %v404
        %v413 = vmul.f32 %v396, %v405
        %v414 = vmul.f32 %v356, %v402
        %v415 = vmul.f32 %v370, %v403
        %v416 = vmul.f32 %v384, %v404
        %v417 = vmul.f32 %v398, %v405
        %v418 = vld [vmem:[#allocation8] sm:$0xf]
        %v420 = vperm.slane %v418, 0
        %v421 = vperm.slane %v418, 1
        %v422 = vperm.slane %v418, 2
        %v423 = vperm.slane %v418, 3
        %v428 = vadd.f32 %v410, %v420
        %v429 = vadd.f32 %v411, %v421
        %v430 = vadd.f32 %v412, %v422
        %v431 = vadd.f32 %v413, %v423
        %v432 = vadd.f32 %v414, %v420
        %v433 = vadd.f32 %v415, %v421
        %v434 = vadd.f32 %v416, %v422
        %v435 = vadd.f32 %v417, %v423
        %v436 = vand.u32 2147483647, %v428
        %vm437 = vcmp.le.f32.partialorder %v436, 0.7853982
        %vm438 = vcmp.lt.s32.totalorder %v428, 0
        %v439 = vand.u32 %v428, 2139095040
        %v440 = vshrl.u32 %v439, 23
        %v441 = vsub.s32 %v440, 127
        %v442 = vand.u32 2147483647, %v428
        %v443 = vand.u32 %v442, 8388607
        %v444 = vor.u32 %v443, 8388608
        %v445 = vsub.s32 0, %v444
        %v446 = vadd.s32 %v441, 1
        %vm447 = vcmp.gt.s32.totalorder %v446, 0
        %v448 = vsel %vm447, %v446, 0
        %v449 = vshrl.u32 %v448, 5
        %v450 = vand.u32 %v448, 31
        %v451 = vsub.s32 32, %v450
        %v452 = vshrl.u32 683565275, %v451
        %v453 = vshll.u32 683565275, %v450
        %v454 = vshrl.u32 2475754826, %v451
        %v455 = vor.u32 %v453, %v454
        %v456 = vshll.u32 2475754826, %v450
        %v457 = vshrl.u32 2131351028, %v451
        %v458 = vor.u32 %v456, %v457
        %v459 = vshll.u32 2131351028, %v450
        %v460 = vshrl.u32 2102212464, %v451
        %v461 = vor.u32 %v459, %v460
        %v462 = vshll.u32 2102212464, %v450
        %v463 = vshrl.u32 920167782, %v451
        %v464 = vor.u32 %v462, %v463
        %v465 = vshll.u32 920167782, %v450
        %v466 = vshrl.u32 1326507024, %v451
        %v467 = vor.u32 %v465, %v466
        %vm468 = vcmp.lt.s32.totalorder %v449, 1
        %vm469 = vcmp.lt.s32.totalorder %v449, 2
        %vm470 = vcmp.lt.s32.totalorder %v449, 3
        %vm471 = vcmp.lt.s32.totalorder %v449, 4
        %v472 = vsel %vm468, %v452, %v455
        %v473 = vsel %vm471, %v461, 2102212464
        %v474 = vsel %vm470, %v458, %v473
        %v475 = vsel %vm469, %v472, %v474
        %v476 = vsel %vm468, %v455, %v458
        %v477 = vsel %vm471, %v464, 920167782
        %v478 = vsel %vm470, %v461, %v477
        %v479 = vsel %vm469, %v476, %v478
        %v480 = vsel %vm468, %v458, %v461
        %v481 = vsel %vm471, %v467, 1326507024
        %v482 = vsel %vm470, %v464, %v481
        %v483 = vsel %vm469, %v480, %v482
        %v484 = vshll.u32 %v444, 8
        %v485 = vand.u32 %v484, 65535
        %v486 = vshrl.u32 %v484, 16
        %v487 = vand.u32 %v483, 65535
        %v488 = vshrl.u32 %v483, 16
        %v489 = vmul.u32 %v485, %v487
        %v490 = vmul.u32 %v485, %v488
        %v491 = vmul.u32 %v486, %v487
        %v492 = vmul.u32 %v486, %v488
        %v493 = vshll.u32 %v490, 16
        %v494 = vshrl.u32 %v490, 16
        %v495 = vshll.u32 %v491, 16
        %v496 = vshrl.u32 %v491, 16
        %vm497 = vc.u32 %v489, %v493
        %v498 = vsel %vm497, 1, 0
        %v499 = vadd.s32 %v489, %v493
        %v500 = vadd.s32 %v492, %v498
        %vm501 = vc.u32 %v499, %v495
        %v502 = vsel %vm501, 1, 0
        %v503 = vadd.s32 %v499, %v495
        %v504 = vadd.s32 %v500, %v502
        %v505 = vadd.s32 %v504, %v494
        %v506 = vadd.s32 %v505, %v496
        %v507 = vand.u32 %v484, 65535
        %v508 = vshrl.u32 %v484, 16
        %v509 = vand.u32 %v479, 65535
        %v510 = vshrl.u32 %v479, 16
        %v511 = vmul.u32 %v507, %v509
        %v512 = vmul.u32 %v507, %v510
        %v513 = vmul.u32 %v508, %v509
        %v514 = vmul.u32 %v508, %v510
        %v515 = vshll.u32 %v512, 16
        %v516 = vshrl.u32 %v512, 16
        %v517 = vshll.u32 %v513, 16
        %v518 = vshrl.u32 %v513, 16
        %vm519 = vc.u32 %v511, %v515
        %v520 = vsel %vm519, 1, 0
        %v521 = vadd.s32 %v511, %v515
        %v522 = vadd.s32 %v514, %v520
        %vm523 = vc.u32 %v521, %v517
        %v524 = vsel %vm523, 1, 0
        %v525 = vadd.s32 %v521, %v517
        %v526 = vadd.s32 %v522, %v524
        %v527 = vadd.s32 %v526, %v516
        %v528 = vadd.s32 %v527, %v518
        %v529 = vmul.u32 %v484, %v475
        %v530 = vadd.s32 %v506, %v525
        %vm531 = vc.u32 %v506, %v525
        %v532 = vadd.s32 %v528, 1
        %v533 = vsel %vm531, %v532, %v528
        %v534 = vadd.s32 %v529, %v533
        %v535 = vadd.s32 %v534, 536870912
        %v536 = vshrl.u32 %v535, 30
        %v537 = vshll.u32 %v536, 30
        %v538 = vsub.s32 %v534, %v537
        %vm539 = vcmp.lt.s32.totalorder %v538, 0
        %v540 = vsub.s32 0, %v538
        %v541 = vsel %vm539, %v540, %v538
        %v542 = vclz %v541
        %v543 = vsub.s32 %v542, 2
        %vm544 = vcmp.gt.s32.totalorder 0, %v543
        %v545 = vsel %vm544, 0, %v543
        %v546 = vsub.s32 32, %v545
        %v547 = vshll.u32 %v538, %v545
        %v548 = vshrl.u32 %v530, %v546
        %v549 = vor.u32 %v547, %v548
        %v550 = vsub.s32 4294967266, %v545
        %v551 = vadd.s32 %v550, 127
        %v552 = vshll.u32 %v551, 23
        %v553 = vor.u32 4788187, %v552
        %v554 = vand.u32 2147483647, %v553
        %v556 = vcvt.s32.f32 %v549
        %v557 = vmul.f32 %v556, %v554
        %v558 = vxor.u32 %v557, 2147483648
        %v559 = vsel %vm438, %v558, %v557
        %v560 = vsub.s32 4, %v536
        %v561 = vsel %vm438, %v560, %v536
        %v562 = vsel %vm437, %v428, %v559
        %v563 = vsel %vm437, 0, %v561
        %v564 = vmul.f32 %v562, %v562
        %v565 = vmul.f32 %v564, -0.001358992
        %v566 = vadd.f32 %v565, 0.041655596
        %v567 = vmul.f32 %v564, %v566
        %v568 = vadd.f32 %v567, -0.4999988
        %v569 = vmul.f32 %v564, %v568
        %v570 = vadd.f32 1.0, %v569
        %v571 = vmul.f32 %v562, %v562
        %v572 = vmul.f32 %v571, -0.00019511016
        %v573 = vadd.f32 %v572, 0.008332121
        %v574 = vmul.f32 %v571, %v573
        %v575 = vadd.f32 %v574, -0.16666654
        %v576 = vmul.f32 %v571, %v575
        %v577 = vadd.f32 %v576, 1.0
        %v578 = vmul.f32 %v577, %v562
        %vm579 = vweird.f32 %v428
        %v580 = vadd.s32 %v563, 3
        %v581 = vand.u32 %v580, 3
        %vm582 = vcmp.lt.s32.totalorder %v581, 2
        %vm583 = vcmp.eq.s32.totalorder %v581, 0
        %v584 = vxor.u32 %v578, 2147483648
        %v585 = vsel %vm583, %v570, %v584
        %vm586 = vcmp.eq.s32.totalorder %v581, 2
        %v587 = vxor.u32 %v570, 2147483648
        %v588 = vsel %vm586, %v587, %v578
        %v589 = vsel %vm582, %v585, %v588
        %v590 = vsel %vm579, nan, %v589
        %v591 = vand.u32 2147483647, %v429
        %vm592 = vcmp.le.f32.partialorder %v591, 0.7853982
        %vm593 = vcmp.lt.s32.totalorder %v429, 0
        %v594 = vand.u32 %v429, 2139095040
        %v595 = vshrl.u32 %v594, 23
        %v596 = vsub.s32 %v595, 127
        %v597 = vand.u32 2147483647, %v429
        %v598 = vand.u32 %v597, 8388607
        %v599 = vor.u32 %v598, 8388608
        %v600 = vsub.s32 0, %v599
        %v601 = vadd.s32 %v596, 1
        %vm602 = vcmp.gt.s32.totalorder %v601, 0
        %v603 = vsel %vm602, %v601, 0
        %v604 = vshrl.u32 %v603, 5
        %v605 = vand.u32 %v603, 31
        %v606 = vsub.s32 32, %v605
        %v607 = vshrl.u32 683565275, %v606
        %v608 = vshll.u32 683565275, %v605
        %v609 = vshrl.u32 2475754826, %v606
        %v610 = vor.u32 %v608, %v609
        %v611 = vshll.u32 2475754826, %v605
        %v612 = vshrl.u32 2131351028, %v606
        %v613 = vor.u32 %v611, %v612
        %v614 = vshll.u32 2131351028, %v605
        %v615 = vshrl.u32 2102212464, %v606
        %v616 = vor.u32 %v614, %v615
        %v617 = vshll.u32 2102212464, %v605
        %v618 = vshrl.u32 920167782, %v606
        %v619 = vor.u32 %v617, %v618
        %v620 = vshll.u32 920167782, %v605
        %v621 = vshrl.u32 1326507024, %v606
        %v622 = vor.u32 %v620, %v621
        %vm623 = vcmp.lt.s32.totalorder %v604, 1
        %vm624 = vcmp.lt.s32.totalorder %v604, 2
        %vm625 = vcmp.lt.s32.totalorder %v604, 3
        %vm626 = vcmp.lt.s32.totalorder %v604, 4
        %v627 = vsel %vm623, %v607, %v610
        %v628 = vsel %vm626, %v616, 2102212464
        %v629 = vsel %vm625, %v613, %v628
        %v630 = vsel %vm624, %v627, %v629
        %v631 = vsel %vm623, %v610, %v613
        %v632 = vsel %vm626, %v619, 920167782
        %v633 = vsel %vm625, %v616, %v632
        %v634 = vsel %vm624, %v631, %v633
        %v635 = vsel %vm623, %v613, %v616
        %v636 = vsel %vm626, %v622, 1326507024
        %v637 = vsel %vm625, %v619, %v636
        %v638 = vsel %vm624, %v635, %v637
        %v639 = vshll.u32 %v599, 8
        %v640 = vand.u32 %v639, 65535
        %v641 = vshrl.u32 %v639, 16
        %v642 = vand.u32 %v638, 65535
        %v643 = vshrl.u32 %v638, 16
        %v644 = vmul.u32 %v640, %v642
        %v645 = vmul.u32 %v640, %v643
        %v646 = vmul.u32 %v641, %v642
        %v647 = vmul.u32 %v641, %v643
        %v648 = vshll.u32 %v645, 16
        %v649 = vshrl.u32 %v645, 16
        %v650 = vshll.u32 %v646, 16
        %v651 = vshrl.u32 %v646, 16
        %vm652 = vc.u32 %v644, %v648
        %v653 = vsel %vm652, 1, 0
        %v654 = vadd.s32 %v644, %v648
        %v655 = vadd.s32 %v647, %v653
        %vm656 = vc.u32 %v654, %v650
        %v657 = vsel %vm656, 1, 0
        %v658 = vadd.s32 %v654, %v650
        %v659 = vadd.s32 %v655, %v657
        %v660 = vadd.s32 %v659, %v649
        %v661 = vadd.s32 %v660, %v651
        %v662 = vand.u32 %v639, 65535
        %v663 = vshrl.u32 %v639, 16
        %v664 = vand.u32 %v634, 65535
        %v665 = vshrl.u32 %v634, 16
        %v666 = vmul.u32 %v662, %v664
        %v667 = vmul.u32 %v662, %v665
        %v668 = vmul.u32 %v663, %v664
        %v669 = vmul.u32 %v663, %v665
        %v670 = vshll.u32 %v667, 16
        %v671 = vshrl.u32 %v667, 16
        %v672 = vshll.u32 %v668, 16
        %v673 = vshrl.u32 %v668, 16
        %vm674 = vc.u32 %v666, %v670
        %v675 = vsel %vm674, 1, 0
        %v676 = vadd.s32 %v666, %v670
        %v677 = vadd.s32 %v669, %v675
        %vm678 = vc.u32 %v676, %v672
        %v679 = vsel %vm678, 1, 0
        %v680 = vadd.s32 %v676, %v672
        %v681 = vadd.s32 %v677, %v679
        %v682 = vadd.s32 %v681, %v671
        %v683 = vadd.s32 %v682, %v673
        %v684 = vmul.u32 %v639, %v630
        %v685 = vadd.s32 %v661, %v680
        %vm686 = vc.u32 %v661, %v680
        %v687 = vadd.s32 %v683, 1
        %v688 = vsel %vm686, %v687, %v683
        %v689 = vadd.s32 %v684, %v688
        %v690 = vadd.s32 %v689, 536870912
        %v691 = vshrl.u32 %v690, 30
        %v692 = vshll.u32 %v691, 30
        %v693 = vsub.s32 %v689, %v692
        %vm694 = vcmp.lt.s32.totalorder %v693, 0
        %v695 = vsub.s32 0, %v693
        %v696 = vsel %vm694, %v695, %v693
        %v697 = vclz %v696
        %v698 = vsub.s32 %v697, 2
        %vm699 = vcmp.gt.s32.totalorder 0, %v698
        %v700 = vsel %vm699, 0, %v698
        %v701 = vsub.s32 32, %v700
        %v702 = vshll.u32 %v693, %v700
        %v703 = vshrl.u32 %v685, %v701
        %v704 = vor.u32 %v702, %v703
        %v705 = vsub.s32 4294967266, %v700
        %v706 = vadd.s32 %v705, 127
        %v707 = vshll.u32 %v706, 23
        %v708 = vor.u32 4788187, %v707
        %v709 = vand.u32 2147483647, %v708
        %v711 = vcvt.s32.f32 %v704
        %v712 = vmul.f32 %v711, %v709
        %v713 = vxor.u32 %v712, 2147483648
        %v714 = vsel %vm593, %v713, %v712
        %v715 = vsub.s32 4, %v691
        %v716 = vsel %vm593, %v715, %v691
        %v717 = vsel %vm592, %v429, %v714
        %v718 = vsel %vm592, 0, %v716
        %v719 = vmul.f32 %v717, %v717
        %v720 = vmul.f32 %v719, -0.001358992
        %v721 = vadd.f32 %v720, 0.041655596
        %v722 = vmul.f32 %v719, %v721
        %v723 = vadd.f32 %v722, -0.4999988
        %v724 = vmul.f32 %v719, %v723
        %v725 = vadd.f32 1.0, %v724
        %v726 = vmul.f32 %v717, %v717
        %v727 = vmul.f32 %v726, -0.00019511016
        %v728 = vadd.f32 %v727, 0.008332121
        %v729 = vmul.f32 %v726, %v728
        %v730 = vadd.f32 %v729, -0.16666654
        %v731 = vmul.f32 %v726, %v730
        %v732 = vadd.f32 %v731, 1.0
        %v733 = vmul.f32 %v732, %v717
        %vm734 = vweird.f32 %v429
        %v735 = vadd.s32 %v718, 3
        %v736 = vand.u32 %v735, 3
        %vm737 = vcmp.lt.s32.totalorder %v736, 2
        %vm738 = vcmp.eq.s32.totalorder %v736, 0
        %v739 = vxor.u32 %v733, 2147483648
        %v740 = vsel %vm738, %v725, %v739
        %vm741 = vcmp.eq.s32.totalorder %v736, 2
        %v742 = vxor.u32 %v725, 2147483648
        %v743 = vsel %vm741, %v742, %v733
        %v744 = vsel %vm737, %v740, %v743
        %v745 = vsel %vm734, nan, %v744
        %v746 = vand.u32 2147483647, %v430
        %vm747 = vcmp.le.f32.partialorder %v746, 0.7853982
        %vm748 = vcmp.lt.s32.totalorder %v430, 0
        %v749 = vand.u32 %v430, 2139095040
        %v750 = vshrl.u32 %v749, 23
        %v751 = vsub.s32 %v750, 127
        %v752 = vand.u32 2147483647, %v430
        %v753 = vand.u32 %v752, 8388607
        %v754 = vor.u32 %v753, 8388608
        %v755 = vsub.s32 0, %v754
        %v756 = vadd.s32 %v751, 1
        %vm757 = vcmp.gt.s32.totalorder %v756, 0
        %v758 = vsel %vm757, %v756, 0
        %v759 = vshrl.u32 %v758, 5
        %v760 = vand.u32 %v758, 31
        %v761 = vsub.s32 32, %v760
        %v762 = vshrl.u32 683565275, %v761
        %v763 = vshll.u32 683565275, %v760
        %v764 = vshrl.u32 2475754826, %v761
        %v765 = vor.u32 %v763, %v764
        %v766 = vshll.u32 2475754826, %v760
        %v767 = vshrl.u32 2131351028, %v761
        %v768 = vor.u32 %v766, %v767
        %v769 = vshll.u32 2131351028, %v760
        %v770 = vshrl.u32 2102212464, %v761
        %v771 = vor.u32 %v769, %v770
        %v772 = vshll.u32 2102212464, %v760
        %v773 = vshrl.u32 920167782, %v761
        %v774 = vor.u32 %v772, %v773
        %v775 = vshll.u32 920167782, %v760
        %v776 = vshrl.u32 1326507024, %v761
        %v777 = vor.u32 %v775, %v776
        %vm778 = vcmp.lt.s32.totalorder %v759, 1
        %vm779 = vcmp.lt.s32.totalorder %v759, 2
        %vm780 = vcmp.lt.s32.totalorder %v759, 3
        %vm781 = vcmp.lt.s32.totalorder %v759, 4
        %v782 = vsel %vm778, %v762, %v765
        %v783 = vsel %vm781, %v771, 2102212464
        %v784 = vsel %vm780, %v768, %v783
        %v785 = vsel %vm779, %v782, %v784
        %v786 = vsel %vm778, %v765, %v768
        %v787 = vsel %vm781, %v774, 920167782
        %v788 = vsel %vm780, %v771, %v787
        %v789 = vsel %vm779, %v786, %v788
        %v790 = vsel %vm778, %v768, %v771
        %v791 = vsel %vm781, %v777, 1326507024
        %v792 = vsel %vm780, %v774, %v791
        %v793 = vsel %vm779, %v790, %v792
        %v794 = vshll.u32 %v754, 8
        %v795 = vand.u32 %v794, 65535
        %v796 = vshrl.u32 %v794, 16
        %v797 = vand.u32 %v793, 65535
        %v798 = vshrl.u32 %v793, 16
        %v799 = vmul.u32 %v795, %v797
        %v800 = vmul.u32 %v795, %v798
        %v801 = vmul.u32 %v796, %v797
        %v802 = vmul.u32 %v796, %v798
        %v803 = vshll.u32 %v800, 16
        %v804 = vshrl.u32 %v800, 16
        %v805 = vshll.u32 %v801, 16
        %v806 = vshrl.u32 %v801, 16
        %vm807 = vc.u32 %v799, %v803
        %v808 = vsel %vm807, 1, 0
        %v809 = vadd.s32 %v799, %v803
        %v810 = vadd.s32 %v802, %v808
        %vm811 = vc.u32 %v809, %v805
        %v812 = vsel %vm811, 1, 0
        %v813 = vadd.s32 %v809, %v805
        %v814 = vadd.s32 %v810, %v812
        %v815 = vadd.s32 %v814, %v804
        %v816 = vadd.s32 %v815, %v806
        %v817 = vand.u32 %v794, 65535
        %v818 = vshrl.u32 %v794, 16
        %v819 = vand.u32 %v789, 65535
        %v820 = vshrl.u32 %v789, 16
        %v821 = vmul.u32 %v817, %v819
        %v822 = vmul.u32 %v817, %v820
        %v823 = vmul.u32 %v818, %v819
        %v824 = vmul.u32 %v818, %v820
        %v825 = vshll.u32 %v822, 16
        %v826 = vshrl.u32 %v822, 16
        %v827 = vshll.u32 %v823, 16
        %v828 = vshrl.u32 %v823, 16
        %vm829 = vc.u32 %v821, %v825
        %v830 = vsel %vm829, 1, 0
        %v831 = vadd.s32 %v821, %v825
        %v832 = vadd.s32 %v824, %v830
        %vm833 = vc.u32 %v831, %v827
        %v834 = vsel %vm833, 1, 0
        %v835 = vadd.s32 %v831, %v827
        %v836 = vadd.s32 %v832, %v834
        %v837 = vadd.s32 %v836, %v826
        %v838 = vadd.s32 %v837, %v828
        %v839 = vmul.u32 %v794, %v785
        %v840 = vadd.s32 %v816, %v835
        %vm841 = vc.u32 %v816, %v835
        %v842 = vadd.s32 %v838, 1
        %v843 = vsel %vm841, %v842, %v838
        %v844 = vadd.s32 %v839, %v843
        %v845 = vadd.s32 %v844, 536870912
        %v846 = vshrl.u32 %v845, 30
        %v847 = vshll.u32 %v846, 30
        %v848 = vsub.s32 %v844, %v847
        %vm849 = vcmp.lt.s32.totalorder %v848, 0
        %v850 = vsub.s32 0, %v848
        %v851 = vsel %vm849, %v850, %v848
        %v852 = vclz %v851
        %v853 = vsub.s32 %v852, 2
        %vm854 = vcmp.gt.s32.totalorder 0, %v853
        %v855 = vsel %vm854, 0, %v853
        %v856 = vsub.s32 32, %v855
        %v857 = vshll.u32 %v848, %v855
        %v858 = vshrl.u32 %v840, %v856
        %v859 = vor.u32 %v857, %v858
        %v860 = vsub.s32 4294967266, %v855
        %v861 = vadd.s32 %v860, 127
        %v862 = vshll.u32 %v861, 23
        %v863 = vor.u32 4788187, %v862
        %v864 = vand.u32 2147483647, %v863
        %v866 = vcvt.s32.f32 %v859
        %v867 = vmul.f32 %v866, %v864
        %v868 = vxor.u32 %v867, 2147483648
        %v869 = vsel %vm748, %v868, %v867
        %v870 = vsub.s32 4, %v846
        %v871 = vsel %vm748, %v870, %v846
        %v872 = vsel %vm747, %v430, %v869
        %v873 = vsel %vm747, 0, %v871
        %v874 = vmul.f32 %v872, %v872
        %v875 = vmul.f32 %v874, -0.001358992
        %v876 = vadd.f32 %v875, 0.041655596
        %v877 = vmul.f32 %v874, %v876
        %v878 = vadd.f32 %v877, -0.4999988
        %v879 = vmul.f32 %v874, %v878
        %v880 = vadd.f32 1.0, %v879
        %v881 = vmul.f32 %v872, %v872
        %v882 = vmul.f32 %v881, -0.00019511016
        %v883 = vadd.f32 %v882, 0.008332121
        %v884 = vmul.f32 %v881, %v883
        %v885 = vadd.f32 %v884, -0.16666654
        %v886 = vmul.f32 %v881, %v885
        %v887 = vadd.f32 %v886, 1.0
        %v888 = vmul.f32 %v887, %v872
        %vm889 = vweird.f32 %v430
        %v890 = vadd.s32 %v873, 3
        %v891 = vand.u32 %v890, 3
        %vm892 = vcmp.lt.s32.totalorder %v891, 2
        %vm893 = vcmp.eq.s32.totalorder %v891, 0
        %v894 = vxor.u32 %v888, 2147483648
        %v895 = vsel %vm893, %v880, %v894
        %vm896 = vcmp.eq.s32.totalorder %v891, 2
        %v897 = vxor.u32 %v880, 2147483648
        %v898 = vsel %vm896, %v897, %v888
        %v899 = vsel %vm892, %v895, %v898
        %v900 = vsel %vm889, nan, %v899
        %v901 = vand.u32 2147483647, %v431
        %vm902 = vcmp.le.f32.partialorder %v901, 0.7853982
        %vm903 = vcmp.lt.s32.totalorder %v431, 0
        %v904 = vand.u32 %v431, 2139095040
        %v905 = vshrl.u32 %v904, 23
        %v906 = vsub.s32 %v905, 127
        %v907 = vand.u32 2147483647, %v431
        %v908 = vand.u32 %v907, 8388607
        %v909 = vor.u32 %v908, 8388608
        %v910 = vsub.s32 0, %v909
        %v911 = vadd.s32 %v906, 1
        %vm912 = vcmp.gt.s32.totalorder %v911, 0
        %v913 = vsel %vm912, %v911, 0
        %v914 = vshrl.u32 %v913, 5
        %v915 = vand.u32 %v913, 31
        %v916 = vsub.s32 32, %v915
        %v917 = vshrl.u32 683565275, %v916
        %v918 = vshll.u32 683565275, %v915
        %v919 = vshrl.u32 2475754826, %v916
        %v920 = vor.u32 %v918, %v919
        %v921 = vshll.u32 2475754826, %v915
        %v922 = vshrl.u32 2131351028, %v916
        %v923 = vor.u32 %v921, %v922
        %v924 = vshll.u32 2131351028, %v915
        %v925 = vshrl.u32 2102212464, %v916
        %v926 = vor.u32 %v924, %v925
        %v927 = vshll.u32 2102212464, %v915
        %v928 = vshrl.u32 920167782, %v916
        %v929 = vor.u32 %v927, %v928
        %v930 = vshll.u32 920167782, %v915
        %v931 = vshrl.u32 1326507024, %v916
        %v932 = vor.u32 %v930, %v931
        %vm933 = vcmp.lt.s32.totalorder %v914, 1
        %vm934 = vcmp.lt.s32.totalorder %v914, 2
        %vm935 = vcmp.lt.s32.totalorder %v914, 3
        %vm936 = vcmp.lt.s32.totalorder %v914, 4
        %v937 = vsel %vm933, %v917, %v920
        %v938 = vsel %vm936, %v926, 2102212464
        %v939 = vsel %vm935, %v923, %v938
        %v940 = vsel %vm934, %v937, %v939
        %v941 = vsel %vm933, %v920, %v923
        %v942 = vsel %vm936, %v929, 920167782
        %v943 = vsel %vm935, %v926, %v942
        %v944 = vsel %vm934, %v941, %v943
        %v945 = vsel %vm933, %v923, %v926
        %v946 = vsel %vm936, %v932, 1326507024
        %v947 = vsel %vm935, %v929, %v946
        %v948 = vsel %vm934, %v945, %v947
        %v949 = vshll.u32 %v909, 8
        %v950 = vand.u32 %v949, 65535
        %v951 = vshrl.u32 %v949, 16
        %v952 = vand.u32 %v948, 65535
        %v953 = vshrl.u32 %v948, 16
        %v954 = vmul.u32 %v950, %v952
        %v955 = vmul.u32 %v950, %v953
        %v956 = vmul.u32 %v951, %v952
        %v957 = vmul.u32 %v951, %v953
        %v958 = vshll.u32 %v955, 16
        %v959 = vshrl.u32 %v955, 16
        %v960 = vshll.u32 %v956, 16
        %v961 = vshrl.u32 %v956, 16
        %vm962 = vc.u32 %v954, %v958
        %v963 = vsel %vm962, 1, 0
        %v964 = vadd.s32 %v954, %v958
        %v965 = vadd.s32 %v957, %v963
        %vm966 = vc.u32 %v964, %v960
        %v967 = vsel %vm966, 1, 0
        %v968 = vadd.s32 %v964, %v960
        %v969 = vadd.s32 %v965, %v967
        %v970 = vadd.s32 %v969, %v959
        %v971 = vadd.s32 %v970, %v961
        %v972 = vand.u32 %v949, 65535
        %v973 = vshrl.u32 %v949, 16
        %v974 = vand.u32 %v944, 65535
        %v975 = vshrl.u32 %v944, 16
        %v976 = vmul.u32 %v972, %v974
        %v977 = vmul.u32 %v972, %v975
        %v978 = vmul.u32 %v973, %v974
        %v979 = vmul.u32 %v973, %v975
        %v980 = vshll.u32 %v977, 16
        %v981 = vshrl.u32 %v977, 16
        %v982 = vshll.u32 %v978, 16
        %v983 = vshrl.u32 %v978, 16
        %vm984 = vc.u32 %v976, %v980
        %v985 = vsel %vm984, 1, 0
        %v986 = vadd.s32 %v976, %v980
        %v987 = vadd.s32 %v979, %v985
        %vm988 = vc.u32 %v986, %v982
        %v989 = vsel %vm988, 1, 0
        %v990 = vadd.s32 %v986, %v982
        %v991 = vadd.s32 %v987, %v989
        %v992 = vadd.s32 %v991, %v981
        %v993 = vadd.s32 %v992, %v983
        %v994 = vmul.u32 %v949, %v940
        %v995 = vadd.s32 %v971, %v990
        %vm996 = vc.u32 %v971, %v990
        %v997 = vadd.s32 %v993, 1
        %v998 = vsel %vm996, %v997, %v993
        %v999 = vadd.s32 %v994, %v998
        %v1000 = vadd.s32 %v999, 536870912
        %v1001 = vshrl.u32 %v1000, 30
        %v1002 = vshll.u32 %v1001, 30
        %v1003 = vsub.s32 %v999, %v1002
        %vm1004 = vcmp.lt.s32.totalorder %v1003, 0
        %v1005 = vsub.s32 0, %v1003
        %v1006 = vsel %vm1004, %v1005, %v1003
        %v1007 = vclz %v1006
        %v1008 = vsub.s32 %v1007, 2
        %vm1009 = vcmp.gt.s32.totalorder 0, %v1008
        %v1010 = vsel %vm1009, 0, %v1008
        %v1011 = vsub.s32 32, %v1010
        %v1012 = vshll.u32 %v1003, %v1010
        %v1013 = vshrl.u32 %v995, %v1011
        %v1014 = vor.u32 %v1012, %v1013
        %v1015 = vsub.s32 4294967266, %v1010
        %v1016 = vadd.s32 %v1015, 127
        %v1017 = vshll.u32 %v1016, 23
        %v1018 = vor.u32 4788187, %v1017
        %v1019 = vand.u32 2147483647, %v1018
        %v1021 = vcvt.s32.f32 %v1014
        %v1022 = vmul.f32 %v1021, %v1019
        %v1023 = vxor.u32 %v1022, 2147483648
        %v1024 = vsel %vm903, %v1023, %v1022
        %v1025 = vsub.s32 4, %v1001
        %v1026 = vsel %vm903, %v1025, %v1001
        %v1027 = vsel %vm902, %v431, %v1024
        %v1028 = vsel %vm902, 0, %v1026
        %v1029 = vmul.f32 %v1027, %v1027
        %v1030 = vmul.f32 %v1029, -0.001358992
        %v1031 = vadd.f32 %v1030, 0.041655596
        %v1032 = vmul.f32 %v1029, %v1031
        %v1033 = vadd.f32 %v1032, -0.4999988
        %v1034 = vmul.f32 %v1029, %v1033
        %v1035 = vadd.f32 1.0, %v1034
        %v1036 = vmul.f32 %v1027, %v1027
        %v1037 = vmul.f32 %v1036, -0.00019511016
        %v1038 = vadd.f32 %v1037, 0.008332121
        %v1039 = vmul.f32 %v1036, %v1038
        %v1040 = vadd.f32 %v1039, -0.16666654
        %v1041 = vmul.f32 %v1036, %v1040
        %v1042 = vadd.f32 %v1041, 1.0
        %v1043 = vmul.f32 %v1042, %v1027
        %vm1044 = vweird.f32 %v431
        %v1045 = vadd.s32 %v1028, 3
        %v1046 = vand.u32 %v1045, 3
        %vm1047 = vcmp.lt.s32.totalorder %v1046, 2
        %vm1048 = vcmp.eq.s32.totalorder %v1046, 0
        %v1049 = vxor.u32 %v1043, 2147483648
        %v1050 = vsel %vm1048, %v1035, %v1049
        %vm1051 = vcmp.eq.s32.totalorder %v1046, 2
        %v1052 = vxor.u32 %v1035, 2147483648
        %v1053 = vsel %vm1051, %v1052, %v1043
        %v1054 = vsel %vm1047, %v1050, %v1053
        %v1055 = vsel %vm1044, nan, %v1054
        %v1056 = vand.u32 2147483647, %v432
        %vm1057 = vcmp.le.f32.partialorder %v1056, 0.7853982
        %vm1058 = vcmp.lt.s32.totalorder %v432, 0
        %v1059 = vand.u32 %v432, 2139095040
        %v1060 = vshrl.u32 %v1059, 23
        %v1061 = vsub.s32 %v1060, 127
        %v1062 = vand.u32 2147483647, %v432
        %v1063 = vand.u32 %v1062, 8388607
        %v1064 = vor.u32 %v1063, 8388608
        %v1065 = vsub.s32 0, %v1064
        %v1066 = vadd.s32 %v1061, 1
        %vm1067 = vcmp.gt.s32.totalorder %v1066, 0
        %v1068 = vsel %vm1067, %v1066, 0
        %v1069 = vshrl.u32 %v1068, 5
        %v1070 = vand.u32 %v1068, 31
        %v1071 = vsub.s32 32, %v1070
        %v1072 = vshrl.u32 683565275, %v1071
        %v1073 = vshll.u32 683565275, %v1070
        %v1074 = vshrl.u32 2475754826, %v1071
        %v1075 = vor.u32 %v1073, %v1074
        %v1076 = vshll.u32 2475754826, %v1070
        %v1077 = vshrl.u32 2131351028, %v1071
        %v1078 = vor.u32 %v1076, %v1077
        %v1079 = vshll.u32 2131351028, %v1070
        %v1080 = vshrl.u32 2102212464, %v1071
        %v1081 = vor.u32 %v1079, %v1080
        %v1082 = vshll.u32 2102212464, %v1070
        %v1083 = vshrl.u32 920167782, %v1071
        %v1084 = vor.u32 %v1082, %v1083
        %v1085 = vshll.u32 920167782, %v1070
        %v1086 = vshrl.u32 1326507024, %v1071
        %v1087 = vor.u32 %v1085, %v1086
        %vm1088 = vcmp.lt.s32.totalorder %v1069, 1
        %vm1089 = vcmp.lt.s32.totalorder %v1069, 2
        %vm1090 = vcmp.lt.s32.totalorder %v1069, 3
        %vm1091 = vcmp.lt.s32.totalorder %v1069, 4
        %v1092 = vsel %vm1088, %v1072, %v1075
        %v1093 = vsel %vm1091, %v1081, 2102212464
        %v1094 = vsel %vm1090, %v1078, %v1093
        %v1095 = vsel %vm1089, %v1092, %v1094
        %v1096 = vsel %vm1088, %v1075, %v1078
        %v1097 = vsel %vm1091, %v1084, 920167782
        %v1098 = vsel %vm1090, %v1081, %v1097
        %v1099 = vsel %vm1089, %v1096, %v1098
        %v1100 = vsel %vm1088, %v1078, %v1081
        %v1101 = vsel %vm1091, %v1087, 1326507024
        %v1102 = vsel %vm1090, %v1084, %v1101
        %v1103 = vsel %vm1089, %v1100, %v1102
        %v1104 = vshll.u32 %v1064, 8
        %v1105 = vand.u32 %v1104, 65535
        %v1106 = vshrl.u32 %v1104, 16
        %v1107 = vand.u32 %v1103, 65535
        %v1108 = vshrl.u32 %v1103, 16
        %v1109 = vmul.u32 %v1105, %v1107
        %v1110 = vmul.u32 %v1105, %v1108
        %v1111 = vmul.u32 %v1106, %v1107
        %v1112 = vmul.u32 %v1106, %v1108
        %v1113 = vshll.u32 %v1110, 16
        %v1114 = vshrl.u32 %v1110, 16
        %v1115 = vshll.u32 %v1111, 16
        %v1116 = vshrl.u32 %v1111, 16
        %vm1117 = vc.u32 %v1109, %v1113
        %v1118 = vsel %vm1117, 1, 0
        %v1119 = vadd.s32 %v1109, %v1113
        %v1120 = vadd.s32 %v1112, %v1118
        %vm1121 = vc.u32 %v1119, %v1115
        %v1122 = vsel %vm1121, 1, 0
        %v1123 = vadd.s32 %v1119, %v1115
        %v1124 = vadd.s32 %v1120, %v1122
        %v1125 = vadd.s32 %v1124, %v1114
        %v1126 = vadd.s32 %v1125, %v1116
        %v1127 = vand.u32 %v1104, 65535
        %v1128 = vshrl.u32 %v1104, 16
        %v1129 = vand.u32 %v1099, 65535
        %v1130 = vshrl.u32 %v1099, 16
        %v1131 = vmul.u32 %v1127, %v1129
        %v1132 = vmul.u32 %v1127, %v1130
        %v1133 = vmul.u32 %v1128, %v1129
        %v1134 = vmul.u32 %v1128, %v1130
        %v1135 = vshll.u32 %v1132, 16
        %v1136 = vshrl.u32 %v1132, 16
        %v1137 = vshll.u32 %v1133, 16
        %v1138 = vshrl.u32 %v1133, 16
        %vm1139 = vc.u32 %v1131, %v1135
        %v1140 = vsel %vm1139, 1, 0
        %v1141 = vadd.s32 %v1131, %v1135
        %v1142 = vadd.s32 %v1134, %v1140
        %vm1143 = vc.u32 %v1141, %v1137
        %v1144 = vsel %vm1143, 1, 0
        %v1145 = vadd.s32 %v1141, %v1137
        %v1146 = vadd.s32 %v1142, %v1144
        %v1147 = vadd.s32 %v1146, %v1136
        %v1148 = vadd.s32 %v1147, %v1138
        %v1149 = vmul.u32 %v1104, %v1095
        %v1150 = vadd.s32 %v1126, %v1145
        %vm1151 = vc.u32 %v1126, %v1145
        %v1152 = vadd.s32 %v1148, 1
        %v1153 = vsel %vm1151, %v1152, %v1148
        %v1154 = vadd.s32 %v1149, %v1153
        %v1155 = vadd.s32 %v1154, 536870912
        %v1156 = vshrl.u32 %v1155, 30
        %v1157 = vshll.u32 %v1156, 30
        %v1158 = vsub.s32 %v1154, %v1157
        %vm1159 = vcmp.lt.s32.totalorder %v1158, 0
        %v1160 = vsub.s32 0, %v1158
        %v1161 = vsel %vm1159, %v1160, %v1158
        %v1162 = vclz %v1161
        %v1163 = vsub.s32 %v1162, 2
        %vm1164 = vcmp.gt.s32.totalorder 0, %v1163
        %v1165 = vsel %vm1164, 0, %v1163
        %v1166 = vsub.s32 32, %v1165
        %v1167 = vshll.u32 %v1158, %v1165
        %v1168 = vshrl.u32 %v1150, %v1166
        %v1169 = vor.u32 %v1167, %v1168
        %v1170 = vsub.s32 4294967266, %v1165
        %v1171 = vadd.s32 %v1170, 127
        %v1172 = vshll.u32 %v1171, 23
        %v1173 = vor.u32 4788187, %v1172
        %v1174 = vand.u32 2147483647, %v1173
        %v1176 = vcvt.s32.f32 %v1169
        %v1177 = vmul.f32 %v1176, %v1174
        %v1178 = vxor.u32 %v1177, 2147483648
        %v1179 = vsel %vm1058, %v1178, %v1177
        %v1180 = vsub.s32 4, %v1156
        %v1181 = vsel %vm1058, %v1180, %v1156
        %v1182 = vsel %vm1057, %v432, %v1179
        %v1183 = vsel %vm1057, 0, %v1181
        %v1184 = vmul.f32 %v1182, %v1182
        %v1185 = vmul.f32 %v1184, -0.001358992
        %v1186 = vadd.f32 %v1185, 0.041655596
        %v1187 = vmul.f32 %v1184, %v1186
        %v1188 = vadd.f32 %v1187, -0.4999988
        %v1189 = vmul.f32 %v1184, %v1188
        %v1190 = vadd.f32 1.0, %v1189
        %v1191 = vmul.f32 %v1182, %v1182
        %v1192 = vmul.f32 %v1191, -0.00019511016
        %v1193 = vadd.f32 %v1192, 0.008332121
        %v1194 = vmul.f32 %v1191, %v1193
        %v1195 = vadd.f32 %v1194, -0.16666654
        %v1196 = vmul.f32 %v1191, %v1195
        %v1197 = vadd.f32 %v1196, 1.0
        %v1198 = vmul.f32 %v1197, %v1182
        %vm1199 = vweird.f32 %v432
        %v1200 = vadd.s32 %v1183, 3
        %v1201 = vand.u32 %v1200, 3
        %vm1202 = vcmp.lt.s32.totalorder %v1201, 2
        %vm1203 = vcmp.eq.s32.totalorder %v1201, 0
        %v1204 = vxor.u32 %v1198, 2147483648
        %v1205 = vsel %vm1203, %v1190, %v1204
        %vm1206 = vcmp.eq.s32.totalorder %v1201, 2
        %v1207 = vxor.u32 %v1190, 2147483648
        %v1208 = vsel %vm1206, %v1207, %v1198
        %v1209 = vsel %vm1202, %v1205, %v1208
        %v1210 = vsel %vm1199, nan, %v1209
        %v1211 = vand.u32 2147483647, %v433
        %vm1212 = vcmp.le.f32.partialorder %v1211, 0.7853982
        %vm1213 = vcmp.lt.s32.totalorder %v433, 0
        %v1214 = vand.u32 %v433, 2139095040
        %v1215 = vshrl.u32 %v1214, 23
        %v1216 = vsub.s32 %v1215, 127
        %v1217 = vand.u32 2147483647, %v433
        %v1218 = vand.u32 %v1217, 8388607
        %v1219 = vor.u32 %v1218, 8388608
        %v1220 = vsub.s32 0, %v1219
        %v1221 = vadd.s32 %v1216, 1
        %vm1222 = vcmp.gt.s32.totalorder %v1221, 0
        %v1223 = vsel %vm1222, %v1221, 0
        %v1224 = vshrl.u32 %v1223, 5
        %v1225 = vand.u32 %v1223, 31
        %v1226 = vsub.s32 32, %v1225
        %v1227 = vshrl.u32 683565275, %v1226
        %v1228 = vshll.u32 683565275, %v1225
        %v1229 = vshrl.u32 2475754826, %v1226
        %v1230 = vor.u32 %v1228, %v1229
        %v1231 = vshll.u32 2475754826, %v1225
        %v1232 = vshrl.u32 2131351028, %v1226
        %v1233 = vor.u32 %v1231, %v1232
        %v1234 = vshll.u32 2131351028, %v1225
        %v1235 = vshrl.u32 2102212464, %v1226
        %v1236 = vor.u32 %v1234, %v1235
        %v1237 = vshll.u32 2102212464, %v1225
        %v1238 = vshrl.u32 920167782, %v1226
        %v1239 = vor.u32 %v1237, %v1238
        %v1240 = vshll.u32 920167782, %v1225
        %v1241 = vshrl.u32 1326507024, %v1226
        %v1242 = vor.u32 %v1240, %v1241
        %vm1243 = vcmp.lt.s32.totalorder %v1224, 1
        %vm1244 = vcmp.lt.s32.totalorder %v1224, 2
        %vm1245 = vcmp.lt.s32.totalorder %v1224, 3
        %vm1246 = vcmp.lt.s32.totalorder %v1224, 4
        %v1247 = vsel %vm1243, %v1227, %v1230
        %v1248 = vsel %vm1246, %v1236, 2102212464
        %v1249 = vsel %vm1245, %v1233, %v1248
        %v1250 = vsel %vm1244, %v1247, %v1249
        %v1251 = vsel %vm1243, %v1230, %v1233
        %v1252 = vsel %vm1246, %v1239, 920167782
        %v1253 = vsel %vm1245, %v1236, %v1252
        %v1254 = vsel %vm1244, %v1251, %v1253
        %v1255 = vsel %vm1243, %v1233, %v1236
        %v1256 = vsel %vm1246, %v1242, 1326507024
        %v1257 = vsel %vm1245, %v1239, %v1256
        %v1258 = vsel %vm1244, %v1255, %v1257
        %v1259 = vshll.u32 %v1219, 8
        %v1260 = vand.u32 %v1259, 65535
        %v1261 = vshrl.u32 %v1259, 16
        %v1262 = vand.u32 %v1258, 65535
        %v1263 = vshrl.u32 %v1258, 16
        %v1264 = vmul.u32 %v1260, %v1262
        %v1265 = vmul.u32 %v1260, %v1263
        %v1266 = vmul.u32 %v1261, %v1262
        %v1267 = vmul.u32 %v1261, %v1263
        %v1268 = vshll.u32 %v1265, 16
        %v1269 = vshrl.u32 %v1265, 16
        %v1270 = vshll.u32 %v1266, 16
        %v1271 = vshrl.u32 %v1266, 16
        %vm1272 = vc.u32 %v1264, %v1268
        %v1273 = vsel %vm1272, 1, 0
        %v1274 = vadd.s32 %v1264, %v1268
        %v1275 = vadd.s32 %v1267, %v1273
        %vm1276 = vc.u32 %v1274, %v1270
        %v1277 = vsel %vm1276, 1, 0
        %v1278 = vadd.s32 %v1274, %v1270
        %v1279 = vadd.s32 %v1275, %v1277
        %v1280 = vadd.s32 %v1279, %v1269
        %v1281 = vadd.s32 %v1280, %v1271
        %v1282 = vand.u32 %v1259, 65535
        %v1283 = vshrl.u32 %v1259, 16
        %v1284 = vand.u32 %v1254, 65535
        %v1285 = vshrl.u32 %v1254, 16
        %v1286 = vmul.u32 %v1282, %v1284
        %v1287 = vmul.u32 %v1282, %v1285
        %v1288 = vmul.u32 %v1283, %v1284
        %v1289 = vmul.u32 %v1283, %v1285
        %v1290 = vshll.u32 %v1287, 16
        %v1291 = vshrl.u32 %v1287, 16
        %v1292 = vshll.u32 %v1288, 16
        %v1293 = vshrl.u32 %v1288, 16
        %vm1294 = vc.u32 %v1286, %v1290
        %v1295 = vsel %vm1294, 1, 0
        %v1296 = vadd.s32 %v1286, %v1290
        %v1297 = vadd.s32 %v1289, %v1295
        %vm1298 = vc.u32 %v1296, %v1292
        %v1299 = vsel %vm1298, 1, 0
        %v1300 = vadd.s32 %v1296, %v1292
        %v1301 = vadd.s32 %v1297, %v1299
        %v1302 = vadd.s32 %v1301, %v1291
        %v1303 = vadd.s32 %v1302, %v1293
        %v1304 = vmul.u32 %v1259, %v1250
        %v1305 = vadd.s32 %v1281, %v1300
        %vm1306 = vc.u32 %v1281, %v1300
        %v1307 = vadd.s32 %v1303, 1
        %v1308 = vsel %vm1306, %v1307, %v1303
        %v1309 = vadd.s32 %v1304, %v1308
        %v1310 = vadd.s32 %v1309, 536870912
        %v1311 = vshrl.u32 %v1310, 30
        %v1312 = vshll.u32 %v1311, 30
        %v1313 = vsub.s32 %v1309, %v1312
        %vm1314 = vcmp.lt.s32.totalorder %v1313, 0
        %v1315 = vsub.s32 0, %v1313
        %v1316 = vsel %vm1314, %v1315, %v1313
        %v1317 = vclz %v1316
        %v1318 = vsub.s32 %v1317, 2
        %vm1319 = vcmp.gt.s32.totalorder 0, %v1318
        %v1320 = vsel %vm1319, 0, %v1318
        %v1321 = vsub.s32 32, %v1320
        %v1322 = vshll.u32 %v1313, %v1320
        %v1323 = vshrl.u32 %v1305, %v1321
        %v1324 = vor.u32 %v1322, %v1323
        %v1325 = vsub.s32 4294967266, %v1320
        %v1326 = vadd.s32 %v1325, 127
        %v1327 = vshll.u32 %v1326, 23
        %v1328 = vor.u32 4788187, %v1327
        %v1329 = vand.u32 2147483647, %v1328
        %v1331 = vcvt.s32.f32 %v1324
        %v1332 = vmul.f32 %v1331, %v1329
        %v1333 = vxor.u32 %v1332, 2147483648
        %v1334 = vsel %vm1213, %v1333, %v1332
        %v1335 = vsub.s32 4, %v1311
        %v1336 = vsel %vm1213, %v1335, %v1311
        %v1337 = vsel %vm1212, %v433, %v1334
        %v1338 = vsel %vm1212, 0, %v1336
        %v1339 = vmul.f32 %v1337, %v1337
        %v1340 = vmul.f32 %v1339, -0.001358992
        %v1341 = vadd.f32 %v1340, 0.041655596
        %v1342 = vmul.f32 %v1339, %v1341
        %v1343 = vadd.f32 %v1342, -0.4999988
        %v1344 = vmul.f32 %v1339, %v1343
        %v1345 = vadd.f32 1.0, %v1344
        %v1346 = vmul.f32 %v1337, %v1337
        %v1347 = vmul.f32 %v1346, -0.00019511016
        %v1348 = vadd.f32 %v1347, 0.008332121
        %v1349 = vmul.f32 %v1346, %v1348
        %v1350 = vadd.f32 %v1349, -0.16666654
        %v1351 = vmul.f32 %v1346, %v1350
        %v1352 = vadd.f32 %v1351, 1.0
        %v1353 = vmul.f32 %v1352, %v1337
        %vm1354 = vweird.f32 %v433
        %v1355 = vadd.s32 %v1338, 3
        %v1356 = vand.u32 %v1355, 3
        %vm1357 = vcmp.lt.s32.totalorder %v1356, 2
        %vm1358 = vcmp.eq.s32.totalorder %v1356, 0
        %v1359 = vxor.u32 %v1353, 2147483648
        %v1360 = vsel %vm1358, %v1345, %v1359
        %vm1361 = vcmp.eq.s32.totalorder %v1356, 2
        %v1362 = vxor.u32 %v1345, 2147483648
        %v1363 = vsel %vm1361, %v1362, %v1353
        %v1364 = vsel %vm1357, %v1360, %v1363
        %v1365 = vsel %vm1354, nan, %v1364
        %v1366 = vand.u32 2147483647, %v434
        %vm1367 = vcmp.le.f32.partialorder %v1366, 0.7853982
        %vm1368 = vcmp.lt.s32.totalorder %v434, 0
        %v1369 = vand.u32 %v434, 2139095040
        %v1370 = vshrl.u32 %v1369, 23
        %v1371 = vsub.s32 %v1370, 127
        %v1372 = vand.u32 2147483647, %v434
        %v1373 = vand.u32 %v1372, 8388607
        %v1374 = vor.u32 %v1373, 8388608
        %v1375 = vsub.s32 0, %v1374
        %v1376 = vadd.s32 %v1371, 1
        %vm1377 = vcmp.gt.s32.totalorder %v1376, 0
        %v1378 = vsel %vm1377, %v1376, 0
        %v1379 = vshrl.u32 %v1378, 5
        %v1380 = vand.u32 %v1378, 31
        %v1381 = vsub.s32 32, %v1380
        %v1382 = vshrl.u32 683565275, %v1381
        %v1383 = vshll.u32 683565275, %v1380
        %v1384 = vshrl.u32 2475754826, %v1381
        %v1385 = vor.u32 %v1383, %v1384
        %v1386 = vshll.u32 2475754826, %v1380
        %v1387 = vshrl.u32 2131351028, %v1381
        %v1388 = vor.u32 %v1386, %v1387
        %v1389 = vshll.u32 2131351028, %v1380
        %v1390 = vshrl.u32 2102212464, %v1381
        %v1391 = vor.u32 %v1389, %v1390
        %v1392 = vshll.u32 2102212464, %v1380
        %v1393 = vshrl.u32 920167782, %v1381
        %v1394 = vor.u32 %v1392, %v1393
        %v1395 = vshll.u32 920167782, %v1380
        %v1396 = vshrl.u32 1326507024, %v1381
        %v1397 = vor.u32 %v1395, %v1396
        %vm1398 = vcmp.lt.s32.totalorder %v1379, 1
        %vm1399 = vcmp.lt.s32.totalorder %v1379, 2
        %vm1400 = vcmp.lt.s32.totalorder %v1379, 3
        %vm1401 = vcmp.lt.s32.totalorder %v1379, 4
        %v1402 = vsel %vm1398, %v1382, %v1385
        %v1403 = vsel %vm1401, %v1391, 2102212464
        %v1404 = vsel %vm1400, %v1388, %v1403
        %v1405 = vsel %vm1399, %v1402, %v1404
        %v1406 = vsel %vm1398, %v1385, %v1388
        %v1407 = vsel %vm1401, %v1394, 920167782
        %v1408 = vsel %vm1400, %v1391, %v1407
        %v1409 = vsel %vm1399, %v1406, %v1408
        %v1410 = vsel %vm1398, %v1388, %v1391
        %v1411 = vsel %vm1401, %v1397, 1326507024
        %v1412 = vsel %vm1400, %v1394, %v1411
        %v1413 = vsel %vm1399, %v1410, %v1412
        %v1414 = vshll.u32 %v1374, 8
        %v1415 = vand.u32 %v1414, 65535
        %v1416 = vshrl.u32 %v1414, 16
        %v1417 = vand.u32 %v1413, 65535
        %v1418 = vshrl.u32 %v1413, 16
        %v1419 = vmul.u32 %v1415, %v1417
        %v1420 = vmul.u32 %v1415, %v1418
        %v1421 = vmul.u32 %v1416, %v1417
        %v1422 = vmul.u32 %v1416, %v1418
        %v1423 = vshll.u32 %v1420, 16
        %v1424 = vshrl.u32 %v1420, 16
        %v1425 = vshll.u32 %v1421, 16
        %v1426 = vshrl.u32 %v1421, 16
        %vm1427 = vc.u32 %v1419, %v1423
        %v1428 = vsel %vm1427, 1, 0
        %v1429 = vadd.s32 %v1419, %v1423
        %v1430 = vadd.s32 %v1422, %v1428
        %vm1431 = vc.u32 %v1429, %v1425
        %v1432 = vsel %vm1431, 1, 0
        %v1433 = vadd.s32 %v1429, %v1425
        %v1434 = vadd.s32 %v1430, %v1432
        %v1435 = vadd.s32 %v1434, %v1424
        %v1436 = vadd.s32 %v1435, %v1426
        %v1437 = vand.u32 %v1414, 65535
        %v1438 = vshrl.u32 %v1414, 16
        %v1439 = vand.u32 %v1409, 65535
        %v1440 = vshrl.u32 %v1409, 16
        %v1441 = vmul.u32 %v1437, %v1439
        %v1442 = vmul.u32 %v1437, %v1440
        %v1443 = vmul.u32 %v1438, %v1439
        %v1444 = vmul.u32 %v1438, %v1440
        %v1445 = vshll.u32 %v1442, 16
        %v1446 = vshrl.u32 %v1442, 16
        %v1447 = vshll.u32 %v1443, 16
        %v1448 = vshrl.u32 %v1443, 16
        %vm1449 = vc.u32 %v1441, %v1445
        %v1450 = vsel %vm1449, 1, 0
        %v1451 = vadd.s32 %v1441, %v1445
        %v1452 = vadd.s32 %v1444, %v1450
        %vm1453 = vc.u32 %v1451, %v1447
        %v1454 = vsel %vm1453, 1, 0
        %v1455 = vadd.s32 %v1451, %v1447
        %v1456 = vadd.s32 %v1452, %v1454
        %v1457 = vadd.s32 %v1456, %v1446
        %v1458 = vadd.s32 %v1457, %v1448
        %v1459 = vmul.u32 %v1414, %v1405
        %v1460 = vadd.s32 %v1436, %v1455
        %vm1461 = vc.u32 %v1436, %v1455
        %v1462 = vadd.s32 %v1458, 1
        %v1463 = vsel %vm1461, %v1462, %v1458
        %v1464 = vadd.s32 %v1459, %v1463
        %v1465 = vadd.s32 %v1464, 536870912
        %v1466 = vshrl.u32 %v1465, 30
        %v1467 = vshll.u32 %v1466, 30
        %v1468 = vsub.s32 %v1464, %v1467
        %vm1469 = vcmp.lt.s32.totalorder %v1468, 0
        %v1470 = vsub.s32 0, %v1468
        %v1471 = vsel %vm1469, %v1470, %v1468
        %v1472 = vclz %v1471
        %v1473 = vsub.s32 %v1472, 2
        %vm1474 = vcmp.gt.s32.totalorder 0, %v1473
        %v1475 = vsel %vm1474, 0, %v1473
        %v1476 = vsub.s32 32, %v1475
        %v1477 = vshll.u32 %v1468, %v1475
        %v1478 = vshrl.u32 %v1460, %v1476
        %v1479 = vor.u32 %v1477, %v1478
        %v1480 = vsub.s32 4294967266, %v1475
        %v1481 = vadd.s32 %v1480, 127
        %v1482 = vshll.u32 %v1481, 23
        %v1483 = vor.u32 4788187, %v1482
        %v1484 = vand.u32 2147483647, %v1483
        %v1486 = vcvt.s32.f32 %v1479
        %v1487 = vmul.f32 %v1486, %v1484
        %v1488 = vxor.u32 %v1487, 2147483648
        %v1489 = vsel %vm1368, %v1488, %v1487
        %v1490 = vsub.s32 4, %v1466
        %v1491 = vsel %vm1368, %v1490, %v1466
        %v1492 = vsel %vm1367, %v434, %v1489
        %v1493 = vsel %vm1367, 0, %v1491
        %v1494 = vmul.f32 %v1492, %v1492
        %v1495 = vmul.f32 %v1494, -0.001358992
        %v1496 = vadd.f32 %v1495, 0.041655596
        %v1497 = vmul.f32 %v1494, %v1496
        %v1498 = vadd.f32 %v1497, -0.4999988
        %v1499 = vmul.f32 %v1494, %v1498
        %v1500 = vadd.f32 1.0, %v1499
        %v1501 = vmul.f32 %v1492, %v1492
        %v1502 = vmul.f32 %v1501, -0.00019511016
        %v1503 = vadd.f32 %v1502, 0.008332121
        %v1504 = vmul.f32 %v1501, %v1503
        %v1505 = vadd.f32 %v1504, -0.16666654
        %v1506 = vmul.f32 %v1501, %v1505
        %v1507 = vadd.f32 %v1506, 1.0
        %v1508 = vmul.f32 %v1507, %v1492
        %vm1509 = vweird.f32 %v434
        %v1510 = vadd.s32 %v1493, 3
        %v1511 = vand.u32 %v1510, 3
        %vm1512 = vcmp.lt.s32.totalorder %v1511, 2
        %vm1513 = vcmp.eq.s32.totalorder %v1511, 0
        %v1514 = vxor.u32 %v1508, 2147483648
        %v1515 = vsel %vm1513, %v1500, %v1514
        %vm1516 = vcmp.eq.s32.totalorder %v1511, 2
        %v1517 = vxor.u32 %v1500, 2147483648
        %v1518 = vsel %vm1516, %v1517, %v1508
        %v1519 = vsel %vm1512, %v1515, %v1518
        %v1520 = vsel %vm1509, nan, %v1519
        %v1521 = vand.u32 2147483647, %v435
        %vm1522 = vcmp.le.f32.partialorder %v1521, 0.7853982
        %vm1523 = vcmp.lt.s32.totalorder %v435, 0
        %v1524 = vand.u32 %v435, 2139095040
        %v1525 = vshrl.u32 %v1524, 23
        %v1526 = vsub.s32 %v1525, 127
        %v1527 = vand.u32 2147483647, %v435
        %v1528 = vand.u32 %v1527, 8388607
        %v1529 = vor.u32 %v1528, 8388608
        %v1530 = vsub.s32 0, %v1529
        %v1531 = vadd.s32 %v1526, 1
        %vm1532 = vcmp.gt.s32.totalorder %v1531, 0
        %v1533 = vsel %vm1532, %v1531, 0
        %v1534 = vshrl.u32 %v1533, 5
        %v1535 = vand.u32 %v1533, 31
        %v1536 = vsub.s32 32, %v1535
        %v1537 = vshrl.u32 683565275, %v1536
        %v1538 = vshll.u32 683565275, %v1535
        %v1539 = vshrl.u32 2475754826, %v1536
        %v1540 = vor.u32 %v1538, %v1539
        %v1541 = vshll.u32 2475754826, %v1535
        %v1542 = vshrl.u32 2131351028, %v1536
        %v1543 = vor.u32 %v1541, %v1542
        %v1544 = vshll.u32 2131351028, %v1535
        %v1545 = vshrl.u32 2102212464, %v1536
        %v1546 = vor.u32 %v1544, %v1545
        %v1547 = vshll.u32 2102212464, %v1535
        %v1548 = vshrl.u32 920167782, %v1536
        %v1549 = vor.u32 %v1547, %v1548
        %v1550 = vshll.u32 920167782, %v1535
        %v1551 = vshrl.u32 1326507024, %v1536
        %v1552 = vor.u32 %v1550, %v1551
        %vm1553 = vcmp.lt.s32.totalorder %v1534, 1
        %vm1554 = vcmp.lt.s32.totalorder %v1534, 2
        %vm1555 = vcmp.lt.s32.totalorder %v1534, 3
        %vm1556 = vcmp.lt.s32.totalorder %v1534, 4
        %v1557 = vsel %vm1553, %v1537, %v1540
        %v1558 = vsel %vm1556, %v1546, 2102212464
        %v1559 = vsel %vm1555, %v1543, %v1558
        %v1560 = vsel %vm1554, %v1557, %v1559
        %v1561 = vsel %vm1553, %v1540, %v1543
        %v1562 = vsel %vm1556, %v1549, 920167782
        %v1563 = vsel %vm1555, %v1546, %v1562
        %v1564 = vsel %vm1554, %v1561, %v1563
        %v1565 = vsel %vm1553, %v1543, %v1546
        %v1566 = vsel %vm1556, %v1552, 1326507024
        %v1567 = vsel %vm1555, %v1549, %v1566
        %v1568 = vsel %vm1554, %v1565, %v1567
        %v1569 = vshll.u32 %v1529, 8
        %v1570 = vand.u32 %v1569, 65535
        %v1571 = vshrl.u32 %v1569, 16
        %v1572 = vand.u32 %v1568, 65535
        %v1573 = vshrl.u32 %v1568, 16
        %v1574 = vmul.u32 %v1570, %v1572
        %v1575 = vmul.u32 %v1570, %v1573
        %v1576 = vmul.u32 %v1571, %v1572
        %v1577 = vmul.u32 %v1571, %v1573
        %v1578 = vshll.u32 %v1575, 16
        %v1579 = vshrl.u32 %v1575, 16
        %v1580 = vshll.u32 %v1576, 16
        %v1581 = vshrl.u32 %v1576, 16
        %vm1582 = vc.u32 %v1574, %v1578
        %v1583 = vsel %vm1582, 1, 0
        %v1584 = vadd.s32 %v1574, %v1578
        %v1585 = vadd.s32 %v1577, %v1583
        %vm1586 = vc.u32 %v1584, %v1580
        %v1587 = vsel %vm1586, 1, 0
        %v1588 = vadd.s32 %v1584, %v1580
        %v1589 = vadd.s32 %v1585, %v1587
        %v1590 = vadd.s32 %v1589, %v1579
        %v1591 = vadd.s32 %v1590, %v1581
        %v1592 = vand.u32 %v1569, 65535
        %v1593 = vshrl.u32 %v1569, 16
        %v1594 = vand.u32 %v1564, 65535
        %v1595 = vshrl.u32 %v1564, 16
        %v1596 = vmul.u32 %v1592, %v1594
        %v1597 = vmul.u32 %v1592, %v1595
        %v1598 = vmul.u32 %v1593, %v1594
        %v1599 = vmul.u32 %v1593, %v1595
        %v1600 = vshll.u32 %v1597, 16
        %v1601 = vshrl.u32 %v1597, 16
        %v1602 = vshll.u32 %v1598, 16
        %v1603 = vshrl.u32 %v1598, 16
        %vm1604 = vc.u32 %v1596, %v1600
        %v1605 = vsel %vm1604, 1, 0
        %v1606 = vadd.s32 %v1596, %v1600
        %v1607 = vadd.s32 %v1599, %v1605
        %vm1608 = vc.u32 %v1606, %v1602
        %v1609 = vsel %vm1608, 1, 0
        %v1610 = vadd.s32 %v1606, %v1602
        %v1611 = vadd.s32 %v1607, %v1609
        %v1612 = vadd.s32 %v1611, %v1601
        %v1613 = vadd.s32 %v1612, %v1603
        %v1614 = vmul.u32 %v1569, %v1560
        %v1615 = vadd.s32 %v1591, %v1610
        %vm1616 = vc.u32 %v1591, %v1610
        %v1617 = vadd.s32 %v1613, 1
        %v1618 = vsel %vm1616, %v1617, %v1613
        %v1619 = vadd.s32 %v1614, %v1618
        %v1620 = vadd.s32 %v1619, 536870912
        %v1621 = vshrl.u32 %v1620, 30
        %v1622 = vshll.u32 %v1621, 30
        %v1623 = vsub.s32 %v1619, %v1622
        %vm1624 = vcmp.lt.s32.totalorder %v1623, 0
        %v1625 = vsub.s32 0, %v1623
        %v1626 = vsel %vm1624, %v1625, %v1623
        %v1627 = vclz %v1626
        %v1628 = vsub.s32 %v1627, 2
        %vm1629 = vcmp.gt.s32.totalorder 0, %v1628
        %v1630 = vsel %vm1629, 0, %v1628
        %v1631 = vsub.s32 32, %v1630
        %v1632 = vshll.u32 %v1623, %v1630
        %v1633 = vshrl.u32 %v1615, %v1631
        %v1634 = vor.u32 %v1632, %v1633
        %v1635 = vsub.s32 4294967266, %v1630
        %v1636 = vadd.s32 %v1635, 127
        %v1637 = vshll.u32 %v1636, 23
        %v1638 = vor.u32 4788187, %v1637
        %v1639 = vand.u32 2147483647, %v1638
        %v1641 = vcvt.s32.f32 %v1634
        %v1642 = vmul.f32 %v1641, %v1639
        %v1643 = vxor.u32 %v1642, 2147483648
        %v1644 = vsel %vm1523, %v1643, %v1642
        %v1645 = vsub.s32 4, %v1621
        %v1646 = vsel %vm1523, %v1645, %v1621
        %v1647 = vsel %vm1522, %v435, %v1644
        %v1648 = vsel %vm1522, 0, %v1646
        %v1649 = vmul.f32 %v1647, %v1647
        %v1650 = vmul.f32 %v1649, -0.001358992
        %v1651 = vadd.f32 %v1650, 0.041655596
        %v1652 = vmul.f32 %v1649, %v1651
        %v1653 = vadd.f32 %v1652, -0.4999988
        %v1654 = vmul.f32 %v1649, %v1653
        %v1655 = vadd.f32 1.0, %v1654
        %v1656 = vmul.f32 %v1647, %v1647
        %v1657 = vmul.f32 %v1656, -0.00019511016
        %v1658 = vadd.f32 %v1657, 0.008332121
        %v1659 = vmul.f32 %v1656, %v1658
        %v1660 = vadd.f32 %v1659, -0.16666654
        %v1661 = vmul.f32 %v1656, %v1660
        %v1662 = vadd.f32 %v1661, 1.0
        %v1663 = vmul.f32 %v1662, %v1647
        %vm1664 = vweird.f32 %v435
        %v1665 = vadd.s32 %v1648, 3
        %v1666 = vand.u32 %v1665, 3
        %vm1667 = vcmp.lt.s32.totalorder %v1666, 2
        %vm1668 = vcmp.eq.s32.totalorder %v1666, 0
        %v1669 = vxor.u32 %v1663, 2147483648
        %v1670 = vsel %vm1668, %v1655, %v1669
        %vm1671 = vcmp.eq.s32.totalorder %v1666, 2
        %v1672 = vxor.u32 %v1655, 2147483648
        %v1673 = vsel %vm1671, %v1672, %v1663
        %v1674 = vsel %vm1667, %v1670, %v1673
        %v1675 = vsel %vm1664, nan, %v1674
        %1676 = vst [vmem:[%s280] sm:$0xff] %v590
        %1677 = vst [vmem:[%s280 + $0x8] sm:$0xff] %v745
        %1678 = vst [vmem:[%s280 + $0x10] sm:$0xff] %v900
        %1679 = vst [vmem:[%s280 + $0x18] sm:$0xff] %v1055
        %1680 = vst [vmem:[%s280 + $0x20] sm:$0xff] %v1210
        %1681 = vst [vmem:[%s280 + $0x28] sm:$0xff] %v1365
        %1682 = vst [vmem:[%s280 + $0x30] sm:$0xff] %v1520
        %1683 = vst [vmem:[%s280 + $0x38] sm:$0xff] %v1675
        %s1684 = sand.u32 %s136, 1
        %s1685 = scalar_lea.sflag [#allocation4], %s1684
        %s1686 = sand.u32 %s136, 1
        %s1687 = smul.addr %s1686, 64
        %s1688 = scalar_lea.vmem [#allocation10], %s1687
        // Predicated region
        $region53: #{tpu_custom_call.1} parent=35 // pred_check
          %p1689 = pneg %p146
        $region54: #{tpu_custom_call.1} parent=35 // pred_check_branch
          %1691 = sbr.rel (%p1689) target = $region56
        $region55: #{tpu_custom_call.1} parent=35 // pred_region
          %s1692 = smul.u32 2, %s27
          %s1693 = smul.u32 4, %s28
          %1695 = vsyncadd %s1685, 0
          %s1696 = smul.addr %s1692, 4
          %s1697 = sadd.s32 %s1693, %s1696
          %s1698 = smul.addr %s1697, 8
          %s1699 = scalar_lea.hbm %s4, %s1698
          %s1700 = sshll.u32 %s1688, 4
          %s1701 = int_to_ptr.vmem [resolvable:$true] %s1700
          %s1702 = sshll.u32 %s1699, 4
          %s1703 = int_to_ptr.hbm [resolvable:$true] %s1702
          %1708 = dma.vmem_to_hbm [thread:$0]  %s1701, 1024, %s1703, %s1685, 512, 512, 32
        $region56: #{tpu_custom_call.1} parent=35 // pred_fallthru
          _
      $region36: #{tpu_custom_call.1} parent=5 // pred_fallthru
        _
      %p1709 = scmp.le.s32.totalorder 2, %s18
      // Predicated region
      $region57: #{tpu_custom_call.1} parent=5 // pred_check
        %p1710 = pneg %p1709
      $region58: #{tpu_custom_call.1} parent=5 // pred_check_branch
        %1712 = sbr.rel (%p1710) target = $region60
      $region59: #{tpu_custom_call.1} parent=5 // pred_region
        %s1713 = ssub.s32 %s18, 2
        // Predicated region
        $region61: #{tpu_custom_call.1} parent=59 // pred_check
          %p1714 = pneg %p152
        $region62: #{tpu_custom_call.1} parent=59 // pred_check_branch
          %1716 = sbr.rel (%p1714) target = $region64
        $region63: #{tpu_custom_call.1} parent=59 // pred_region
          %s1717 = sand.u32 %s137, 1
          %s1718 = scalar_lea.sflag [#allocation4], %s1717
          %s1719 = sand.u32 %s137, 1
          %s1720 = smul.addr %s1719, 64
          %s1721 = scalar_lea.vmem [#allocation10], %s1720
          %1723 = dma.done %s1718, 1024
        $region64: #{tpu_custom_call.1} parent=59 // pred_fallthru
          _
      $region60: #{tpu_custom_call.1} parent=5 // pred_fallthru
        _
    $region6: #{tpu_custom_call.1} parent=1 // loop_footer
      %s22 = sadd.s32 1, %s18
    $region7: #{tpu_custom_call.1} parent=1 // loop_footer_branch
      %17 = sbr.rel target = $region3
    $region8: #{tpu_custom_call.1} parent=1 // loop_exit
      _
    %1724 = vsyncpa [#allocation3], 1
    %s1725 = scalar_lea.sflag [#allocation3], 1
    %1726 = vsyncpa %s1725, 1
    %1727 = vsyncpa [#allocation6], 1
    %1728 = vsyncpa [#allocation9], 1
    %1729 = vsyncpa [#allocation4], 1
    %s1730 = scalar_lea.sflag [#allocation4], 1
    %1731 = vsyncpa %s1730, 1

</llo_original>
